<compile_context>
chip_gen: v7x
topology: tpu7x:2x2x1
jax: 0.10.0
libtpu: 0.0.40
codegen_flags: <defaults>
</compile_context>

<pallas_src>
import functools

import jax
import jax.numpy as jnp
from jax.experimental import pallas as pl
from jax.experimental.pallas import tpu as pltpu


# ----------------------------------------------------------------------------
# Pallas helpers
# ----------------------------------------------------------------------------
def _vmem_spec(shape):
    nd = len(shape)
    return pl.BlockSpec(shape, lambda i, _nd=nd: (0,) * _nd)


# ----------------------------------------------------------------------------
# Host-side packing of every Linear/TAGConv weight+bias into one f32 slab.
# Per layer block: [round_up(rows,8) rows of W][1 row of bias][pad to 8].
# All column slices start at lane 0, all row offsets are sublane(8)-aligned,
# so the in-kernel static ref slices need no relayout gymnastics.
# ----------------------------------------------------------------------------
def _pack_slab(layers):
    cols_max = max(int(w.shape[1]) for w, _ in layers)
    blocks, meta, r = [], [], 0
    for w, b in layers:
        rows, cols = int(w.shape[0]), int(w.shape[1])
        rows_pad = -(-rows // 8) * 8
        blk = jnp.zeros((rows_pad + 8, cols_max), jnp.float32)
        blk = blk.at[:rows, :cols].set(w.astype(jnp.float32))
        blk = blk.at[rows_pad, :cols].set(b.astype(jnp.float32))
        blocks.append(blk)
        meta.append((r, rows, cols, r + rows_pad))   # (w_row0, rows, cols, b_row)
        r += rows_pad + 8
    return jnp.concatenate(blocks, axis=0), meta


# ----------------------------------------------------------------------------
# Single fused kernel: TAGConv stack -> relu(Linear) -> mean-pool -> MLP ->
# concat -> predictor -> out head.  Everything stays in VMEM/vregs.
# ----------------------------------------------------------------------------
def _fused_kernel(x_ref, a_ref, pool_ref, mol_ref, slab_ref, o_ref, *,
                  K, tag_meta, lin_meta, mlp_meta, pred_meta, out_meta):
    def wb(meta):
        r0, rows, cols, br = meta
        w = slab_ref[r0:r0 + rows, 0:cols]
        b = slab_ref[br:br + 1, 0:cols]
        return w, b

    a = a_ref[...]                       # normalized dense adjacency D^-1/2 A D^-1/2
    h = x_ref[...]

    # --- TAGConv layers: K hops + one merged (K+1)-projection contraction ---
    for meta in tag_meta:
        hops = [h]
        xk = h
        for _ in range(K):               # serial propagation chain (unavoidable)
            xk = jnp.dot(a, xk, preferred_element_type=jnp.float32)
            hops.append(xk)
        hs = jnp.concatenate(hops, axis=-1)          # (N, (K+1)*Fin)
        w, b = wb(meta)                               # ((K+1)*Fin, Fout), (1, Fout)
        h = jnp.dot(hs, w, preferred_element_type=jnp.float32) + b
        # no activation between TAGConv layers (matches the module)

    # --- final GCN Linear + relu ---
    w, b = wb(lin_meta)
    h = jnp.maximum(jnp.dot(h, w, preferred_element_type=jnp.float32) + b, 0.0)

    # --- global_mean_pool as a matmul: pool[B,N] @ h[N,F] ---
    h1 = jnp.dot(pool_ref[...], h, preferred_element_type=jnp.float32)

    # --- MLP stack (relu after every layer, incl. the last) ---
    h2 = mol_ref[...]
    for meta in mlp_meta:
        w, b = wb(meta)
        h2 = jnp.maximum(jnp.dot(h2, w, preferred_element_type=jnp.float32) + b, 0.0)

    # --- cat((h1, h2), dim=1) -> predictor (relu each) -> out head (no act) ---
    hc = jnp.concatenate([h1, h2], axis=-1)
    for meta in pred_meta:
        w, b = wb(meta)
        hc = jnp.maximum(jnp.dot(hc, w, preferred_element_type=jnp.float32) + b, 0.0)
    w, b = wb(out_meta)
    o_ref[...] = (jnp.dot(hc, w, preferred_element_type=jnp.float32) + b
                  ).astype(o_ref.dtype)


# ----------------------------------------------------------------------------
# Plain-JAX glue (one-time scatter builds, jit-fused around the pallas_call)
# ----------------------------------------------------------------------------
def build_norm_adj(edge_index, num_nodes):
    """Dense D^-1/2 A D^-1/2 (gcn_norm, add_self_loops=False, as in TAGConv)."""
    src, dst = edge_index[0], edge_index[1]
    ones = jnp.ones((src.shape[0],), jnp.float32)
    deg = jnp.zeros((num_nodes,), jnp.float32).at[dst].add(ones)
    dis = jnp.where(deg > 0, 1.0 / jnp.sqrt(jnp.where(deg > 0, deg, 1.0)), 0.0)
    vals = dis[src] * dis[dst]
    # .add (not .set) so duplicate edges accumulate like PyG's scatter-add
    return jnp.zeros((num_nodes, num_nodes), jnp.float32).at[dst, src].add(vals)


def build_mean_pool(batch_index, num_graphs):
    onehot = (batch_index[None, :] == jnp.arange(num_graphs)[:, None]).astype(jnp.float32)
    counts = jnp.maximum(jnp.sum(onehot, axis=1, keepdims=True), 1.0)
    return onehot / counts


# ----------------------------------------------------------------------------
# Full TAGConvModel forward (ONE fused Pallas kernel launch)
# ----------------------------------------------------------------------------
def tagconv_model_forward(params, x, edge_index, batch_index, mol_features,
                          num_graphs, K):
    # TODO(synk): only the (n_gcn_outputs>0 and n_mlp_outputs>0) configuration
    # is implemented (the demo config); gcn-only / mlp-only degenerate paths
    # would skip one branch and the concat.
    N = x.shape[0]
    a = build_norm_adj(edge_index, N)
    pool = build_mean_pool(batch_index, num_graphs)

    layers = []
    for (w, b) in params["tag"]:
        layers.append((w.reshape(-1, w.shape[-1]), b))     # ((K+1)*Fin, Fout)
    layers.append(params["gcn_lin"])
    layers.extend(params["mlp"])
    layers.extend(params["pred"])
    layers.append(params["out"])
    slab, meta = _pack_slab(layers)

    n_tag = len(params["tag"])
    n_mlp = len(params["mlp"])
    n_pred = len(params["pred"])
    tag_meta = tuple(meta[:n_tag])
    lin_meta = meta[n_tag]
    mlp_meta = tuple(meta[n_tag + 1:n_tag + 1 + n_mlp])
    pred_meta = tuple(meta[n_tag + 1 + n_mlp:n_tag + 1 + n_mlp + n_pred])
    out_meta = meta[-1]

    B = num_graphs
    out_dim = params["out"][0].shape[1]
    kern = functools.partial(
        _fused_kernel, K=K, tag_meta=tag_meta, lin_meta=lin_meta,
        mlp_meta=mlp_meta, pred_meta=pred_meta, out_meta=out_meta)

    return pl.pallas_call(
        kern,
        out_shape=jax.ShapeDtypeStruct((B, out_dim), jnp.float32),
        grid=(1,),
        in_specs=[_vmem_spec(x.shape), _vmem_spec(a.shape),
                  _vmem_spec(pool.shape), _vmem_spec(mol_features.shape),
                  _vmem_spec(slab.shape)],
        out_specs=_vmem_spec((B, out_dim)),
        compiler_params=pltpu.CompilerParams(dimension_semantics=("arbitrary",)),
    )(x, a, pool, mol_features, slab)


# ----------------------------------------------------------------------------
# Deterministic parameter init
# ----------------------------------------------------------------------------
def init_linear_params(key, fan_in, fan_out):
    k1, k2 = jax.random.split(key)
    bound = 1.0 / (fan_in ** 0.5)
    w = jax.random.uniform(k1, (fan_in, fan_out), jnp.float32, -bound, bound)
    b = jax.random.uniform(k2, (fan_out,), jnp.float32, -bound, bound)
    return w, b


def init_tagconv_params(key, in_ch, out_ch, K):
    # TODO(synk): PyG's TAGConv reset_parameters distribution differs; the
    # forward math and shapes match, init-time parity tests will not.
    ks = jax.random.split(key, K + 2)
    ws = jnp.stack([init_linear_params(ks[k], in_ch, out_ch)[0] for k in range(K + 1)])
    bound = 1.0 / (in_ch ** 0.5)
    b = jax.random.uniform(ks[K + 1], (out_ch,), jnp.float32, -bound, bound)
    return ws, b


# ----------------------------------------------------------------------------
if __name__ == "__main__":
    key = jax.random.PRNGKey(0)
    keys = jax.random.split(key, 4)

    # model config (small, consistent with the module)
    N_NODES, N_GRAPHS = 12, 2
    NODE_DIM = 16
    GCN_HID, GCN_LAYERS, GCN_OUT = 8, 2, 8
    MLP_IN, MLP_HID, MLP_LAYERS, MLP_OUT = 8, 16, 2, 8
    PRED_HID, PRED_LAYERS = 16, 2
    K = 3  # TAGConv default number of hops

    # inputs: two 6-node ring graphs, bidirectional edges
    x = jax.random.normal(keys[0], (N_NODES, NODE_DIM), jnp.float32)
    src_list, dst_list = [], []
    for g in range(N_GRAPHS):
        base = g * 6
        for i in range(6):
            a_, b_ = base + i, base + (i + 1) % 6
            src_list += [a_, b_]
            dst_list += [b_, a_]
    edge_index = jnp.array([src_list, dst_list], dtype=jnp.int32)     # [2, 24]
    batch_index = jnp.array([0] * 6 + [1] * 6, dtype=jnp.int32)       # [12]
    mol_features = jax.random.normal(keys[1], (N_GRAPHS, MLP_IN), jnp.float32)

    kp = jax.random.split(keys[2], 10)
    params = {
        # GCN stack: TAGConv(16->8), TAGConv(8->8), Linear(8->8) (+relu)
        "tag": [init_tagconv_params(kp[0], NODE_DIM, GCN_HID, K),
                init_tagconv_params(kp[1], GCN_HID, GCN_HID, K)],
        "gcn_lin": init_linear_params(kp[2], GCN_HID, GCN_OUT),
        # MLP stack: Linear(8->16), Linear(16->16), Linear(16->8)  (relu each)
        "mlp": [init_linear_params(kp[3], MLP_IN, MLP_HID),
                init_linear_params(kp[4], MLP_HID, MLP_HID),
                init_linear_params(kp[5], MLP_HID, MLP_OUT)],
        # predictor: Linear(16->16), Linear(16->16)  (relu each)
        "pred": [init_linear_params(kp[6], GCN_OUT + MLP_OUT, PRED_HID),
                 init_linear_params(kp[7], PRED_HID, PRED_HID)],
        # out head: Linear(16->1), no activation
        "out": init_linear_params(kp[8], PRED_HID, 1),
    }

    fwd = jax.jit(functools.partial(tagconv_model_forward, num_graphs=N_GRAPHS, K=K))
    out = fwd(params, x, edge_index, batch_index, mol_features)
    out = jax.block_until_ready(out)
    assert out.shape == (N_GRAPHS, 1), out.shape
    assert bool(jnp.all(jnp.isfinite(out)))
    print("KERNEL_OK")
</pallas_src>

<mosaic_0001>
module attributes {stable_mosaic.version = 11 : i64} {
  func.func @_fused_kernel(%arg0: i32, %arg1: memref<12x16xf32, #tpu.memory_space<vmem>>, %arg2: memref<12x12xf32, #tpu.memory_space<vmem>>, %arg3: memref<2x12xf32, #tpu.memory_space<vmem>>, %arg4: memref<2x8xf32, #tpu.memory_space<vmem>>, %arg5: memref<264x16xf32, #tpu.memory_space<vmem>>, %arg6: memref<2x1xf32, #tpu.memory_space<vmem>>) attributes {dimension_semantics = [#tpu.dimension_semantics<arbitrary>], iteration_bounds = array<i64: 1>, scalar_prefetch = 0 : i64, scratch_operands = 0 : i64, tpu.core_type = #tpu.core_type<tc>, window_params = [{pipeline_mode = #tpu.pipeline_mode<synchronous>, transform_indices = @transform_0, window_bounds = array<i64: 12, 16>}, {pipeline_mode = #tpu.pipeline_mode<synchronous>, transform_indices = @transform_1, window_bounds = array<i64: 12, 12>}, {pipeline_mode = #tpu.pipeline_mode<synchronous>, transform_indices = @transform_2, window_bounds = array<i64: 2, 12>}, {pipeline_mode = #tpu.pipeline_mode<synchronous>, transform_indices = @transform_3, window_bounds = array<i64: 2, 8>}, {pipeline_mode = #tpu.pipeline_mode<synchronous>, transform_indices = @transform_4, window_bounds = array<i64: 264, 16>}, {pipeline_mode = #tpu.pipeline_mode<synchronous>, transform_indices = @transform_5, window_bounds = array<i64: 2, 1>}]} {
    %c0 = arith.constant 0 : index
    %c0_0 = arith.constant 0 : index
    %0 = vector.load %arg2[%c0, %c0_0] : memref<12x12xf32, #tpu.memory_space<vmem>>, vector<12x12xf32>
    %c0_1 = arith.constant 0 : index
    %c0_2 = arith.constant 0 : index
    %1 = vector.load %arg1[%c0_1, %c0_2] : memref<12x16xf32, #tpu.memory_space<vmem>>, vector<12x16xf32>
    %cst = arith.constant dense<0.000000e+00> : vector<12x16xf32>
    %2 = tpu.matmul %0, %1, %cst {dimension_numbers = #tpu.dot_dimension_numbers<[1], [0], [0], [1], [0, 0, 1, 1], [], []>} : vector<12x12xf32>, vector<12x16xf32>, vector<12x16xf32> -> vector<12x16xf32>
    %cst_3 = arith.constant dense<0.000000e+00> : vector<12x16xf32>
    %3 = tpu.matmul %0, %2, %cst_3 {dimension_numbers = #tpu.dot_dimension_numbers<[1], [0], [0], [1], [0, 0, 1, 1], [], []>} : vector<12x12xf32>, vector<12x16xf32>, vector<12x16xf32> -> vector<12x16xf32>
    %cst_4 = arith.constant dense<0.000000e+00> : vector<12x16xf32>
    %4 = tpu.matmul %0, %3, %cst_4 {dimension_numbers = #tpu.dot_dimension_numbers<[1], [0], [0], [1], [0, 0, 1, 1], [], []>} : vector<12x12xf32>, vector<12x16xf32>, vector<12x16xf32> -> vector<12x16xf32>
    %5 = tpu.concatenate %1, %2, %3, %4 in 1 : vector<12x16xf32>, vector<12x16xf32>, vector<12x16xf32>, vector<12x16xf32> -> vector<12x64xf32>
    %c0_5 = arith.constant 0 : index
    %c0_6 = arith.constant 0 : index
    %6 = vector.load %arg5[%c0_5, %c0_6] : memref<264x16xf32, #tpu.memory_space<vmem>>, vector<64x8xf32>
    %c64 = arith.constant 64 : index
    %c0_7 = arith.constant 0 : index
    %7 = vector.load %arg5[%c64, %c0_7] : memref<264x16xf32, #tpu.memory_space<vmem>>, vector<1x8xf32>
    %cst_8 = arith.constant dense<0.000000e+00> : vector<12x8xf32>
    %8 = tpu.matmul %5, %6, %cst_8 {dimension_numbers = #tpu.dot_dimension_numbers<[1], [0], [0], [1], [0, 0, 1, 1], [], []>} : vector<12x64xf32>, vector<64x8xf32>, vector<12x8xf32> -> vector<12x8xf32>
    %9 = vector.broadcast %7 : vector<1x8xf32> to vector<12x8xf32>
    %10 = arith.addf %8, %9 : vector<12x8xf32>
    %cst_9 = arith.constant dense<0.000000e+00> : vector<12x8xf32>
    %11 = tpu.matmul %0, %10, %cst_9 {dimension_numbers = #tpu.dot_dimension_numbers<[1], [0], [0], [1], [0, 0, 1, 1], [], []>} : vector<12x12xf32>, vector<12x8xf32>, vector<12x8xf32> -> vector<12x8xf32>
    %cst_10 = arith.constant dense<0.000000e+00> : vector<12x8xf32>
    %12 = tpu.matmul %0, %11, %cst_10 {dimension_numbers = #tpu.dot_dimension_numbers<[1], [0], [0], [1], [0, 0, 1, 1], [], []>} : vector<12x12xf32>, vector<12x8xf32>, vector<12x8xf32> -> vector<12x8xf32>
    %cst_11 = arith.constant dense<0.000000e+00> : vector<12x8xf32>
    %13 = tpu.matmul %0, %12, %cst_11 {dimension_numbers = #tpu.dot_dimension_numbers<[1], [0], [0], [1], [0, 0, 1, 1], [], []>} : vector<12x12xf32>, vector<12x8xf32>, vector<12x8xf32> -> vector<12x8xf32>
    %14 = tpu.concatenate %10, %11, %12, %13 in 1 : vector<12x8xf32>, vector<12x8xf32>, vector<12x8xf32>, vector<12x8xf32> -> vector<12x32xf32>
    %c72 = arith.constant 72 : index
    %c0_12 = arith.constant 0 : index
    %15 = vector.load %arg5[%c72, %c0_12] : memref<264x16xf32, #tpu.memory_space<vmem>>, vector<32x8xf32>
    %c104 = arith.constant 104 : index
    %c0_13 = arith.constant 0 : index
    %16 = vector.load %arg5[%c104, %c0_13] : memref<264x16xf32, #tpu.memory_space<vmem>>, vector<1x8xf32>
    %cst_14 = arith.constant dense<0.000000e+00> : vector<12x8xf32>
    %17 = tpu.matmul %14, %15, %cst_14 {dimension_numbers = #tpu.dot_dimension_numbers<[1], [0], [0], [1], [0, 0, 1, 1], [], []>} : vector<12x32xf32>, vector<32x8xf32>, vector<12x8xf32> -> vector<12x8xf32>
    %18 = vector.broadcast %16 : vector<1x8xf32> to vector<12x8xf32>
    %19 = arith.addf %17, %18 : vector<12x8xf32>
    %c112 = arith.constant 112 : index
    %c0_15 = arith.constant 0 : index
    %20 = vector.load %arg5[%c112, %c0_15] : memref<264x16xf32, #tpu.memory_space<vmem>>, vector<8x8xf32>
    %c120 = arith.constant 120 : index
    %c0_16 = arith.constant 0 : index
    %21 = vector.load %arg5[%c120, %c0_16] : memref<264x16xf32, #tpu.memory_space<vmem>>, vector<1x8xf32>
    %cst_17 = arith.constant dense<0.000000e+00> : vector<12x8xf32>
    %22 = tpu.matmul %19, %20, %cst_17 {dimension_numbers = #tpu.dot_dimension_numbers<[1], [0], [0], [1], [0, 0, 1, 1], [], []>} : vector<12x8xf32>, vector<8x8xf32>, vector<12x8xf32> -> vector<12x8xf32>
    %23 = vector.broadcast %21 : vector<1x8xf32> to vector<12x8xf32>
    %24 = arith.addf %22, %23 : vector<12x8xf32>
    %cst_18 = arith.constant 0.000000e+00 : f32
    %25 = vector.broadcast %cst_18 : f32 to vector<12x8xf32>
    %26 = arith.maximumf %24, %25 : vector<12x8xf32>
    %c0_19 = arith.constant 0 : index
    %c0_20 = arith.constant 0 : index
    %27 = vector.load %arg3[%c0_19, %c0_20] : memref<2x12xf32, #tpu.memory_space<vmem>>, vector<2x12xf32>
    %cst_21 = arith.constant dense<0.000000e+00> : vector<2x8xf32>
    %28 = tpu.matmul %27, %26, %cst_21 {dimension_numbers = #tpu.dot_dimension_numbers<[1], [0], [0], [1], [0, 0, 1, 1], [], []>} : vector<2x12xf32>, vector<12x8xf32>, vector<2x8xf32> -> vector<2x8xf32>
    %c0_22 = arith.constant 0 : index
    %c0_23 = arith.constant 0 : index
    %29 = vector.load %arg4[%c0_22, %c0_23] : memref<2x8xf32, #tpu.memory_space<vmem>>, vector<2x8xf32>
    %c128 = arith.constant 128 : index
    %c0_24 = arith.constant 0 : index
    %30 = vector.load %arg5[%c128, %c0_24] : memref<264x16xf32, #tpu.memory_space<vmem>>, vector<8x16xf32>
    %c136 = arith.constant 136 : index
    %c0_25 = arith.constant 0 : index
    %31 = vector.load %arg5[%c136, %c0_25] : memref<264x16xf32, #tpu.memory_space<vmem>>, vector<1x16xf32>
    %cst_26 = arith.constant dense<0.000000e+00> : vector<2x16xf32>
    %32 = tpu.matmul %29, %30, %cst_26 {dimension_numbers = #tpu.dot_dimension_numbers<[1], [0], [0], [1], [0, 0, 1, 1], [], []>} : vector<2x8xf32>, vector<8x16xf32>, vector<2x16xf32> -> vector<2x16xf32>
    %33 = vector.broadcast %31 : vector<1x16xf32> to vector<2x16xf32>
    %34 = arith.addf %32, %33 : vector<2x16xf32>
    %cst_27 = arith.constant 0.000000e+00 : f32
    %35 = vector.broadcast %cst_27 : f32 to vector<2x16xf32>
    %36 = arith.maximumf %34, %35 : vector<2x16xf32>
    %c144 = arith.constant 144 : index
    %c0_28 = arith.constant 0 : index
    %37 = vector.load %arg5[%c144, %c0_28] : memref<264x16xf32, #tpu.memory_space<vmem>>, vector<16x16xf32>
    %c160 = arith.constant 160 : index
    %c0_29 = arith.constant 0 : index
    %38 = vector.load %arg5[%c160, %c0_29] : memref<264x16xf32, #tpu.memory_space<vmem>>, vector<1x16xf32>
    %cst_30 = arith.constant dense<0.000000e+00> : vector<2x16xf32>
    %39 = tpu.matmul %36, %37, %cst_30 {dimension_numbers = #tpu.dot_dimension_numbers<[1], [0], [0], [1], [0, 0, 1, 1], [], []>} : vector<2x16xf32>, vector<16x16xf32>, vector<2x16xf32> -> vector<2x16xf32>
    %40 = vector.broadcast %38 : vector<1x16xf32> to vector<2x16xf32>
    %41 = arith.addf %39, %40 : vector<2x16xf32>
    %cst_31 = arith.constant 0.000000e+00 : f32
    %42 = vector.broadcast %cst_31 : f32 to vector<2x16xf32>
    %43 = arith.maximumf %41, %42 : vector<2x16xf32>
    %c168 = arith.constant 168 : index
    %c0_32 = arith.constant 0 : index
    %44 = vector.load %arg5[%c168, %c0_32] : memref<264x16xf32, #tpu.memory_space<vmem>>, vector<16x8xf32>
    %c184 = arith.constant 184 : index
    %c0_33 = arith.constant 0 : index
    %45 = vector.load %arg5[%c184, %c0_33] : memref<264x16xf32, #tpu.memory_space<vmem>>, vector<1x8xf32>
    %cst_34 = arith.constant dense<0.000000e+00> : vector<2x8xf32>
    %46 = tpu.matmul %43, %44, %cst_34 {dimension_numbers = #tpu.dot_dimension_numbers<[1], [0], [0], [1], [0, 0, 1, 1], [], []>} : vector<2x16xf32>, vector<16x8xf32>, vector<2x8xf32> -> vector<2x8xf32>
    %47 = vector.broadcast %45 : vector<1x8xf32> to vector<2x8xf32>
    %48 = arith.addf %46, %47 : vector<2x8xf32>
    %cst_35 = arith.constant 0.000000e+00 : f32
    %49 = vector.broadcast %cst_35 : f32 to vector<2x8xf32>
    %50 = arith.maximumf %48, %49 : vector<2x8xf32>
    %51 = tpu.concatenate %28, %50 in 1 : vector<2x8xf32>, vector<2x8xf32> -> vector<2x16xf32>
    %c192 = arith.constant 192 : index
    %c0_36 = arith.constant 0 : index
    %52 = vector.load %arg5[%c192, %c0_36] : memref<264x16xf32, #tpu.memory_space<vmem>>, vector<16x16xf32>
    %c208 = arith.constant 208 : index
    %c0_37 = arith.constant 0 : index
    %53 = vector.load %arg5[%c208, %c0_37] : memref<264x16xf32, #tpu.memory_space<vmem>>, vector<1x16xf32>
    %cst_38 = arith.constant dense<0.000000e+00> : vector<2x16xf32>
    %54 = tpu.matmul %51, %52, %cst_38 {dimension_numbers = #tpu.dot_dimension_numbers<[1], [0], [0], [1], [0, 0, 1, 1], [], []>} : vector<2x16xf32>, vector<16x16xf32>, vector<2x16xf32> -> vector<2x16xf32>
    %55 = vector.broadcast %53 : vector<1x16xf32> to vector<2x16xf32>
    %56 = arith.addf %54, %55 : vector<2x16xf32>
    %cst_39 = arith.constant 0.000000e+00 : f32
    %57 = vector.broadcast %cst_39 : f32 to vector<2x16xf32>
    %58 = arith.maximumf %56, %57 : vector<2x16xf32>
    %c216 = arith.constant 216 : index
    %c0_40 = arith.constant 0 : index
    %59 = vector.load %arg5[%c216, %c0_40] : memref<264x16xf32, #tpu.memory_space<vmem>>, vector<16x16xf32>
    %c232 = arith.constant 232 : index
    %c0_41 = arith.constant 0 : index
    %60 = vector.load %arg5[%c232, %c0_41] : memref<264x16xf32, #tpu.memory_space<vmem>>, vector<1x16xf32>
    %cst_42 = arith.constant dense<0.000000e+00> : vector<2x16xf32>
    %61 = tpu.matmul %58, %59, %cst_42 {dimension_numbers = #tpu.dot_dimension_numbers<[1], [0], [0], [1], [0, 0, 1, 1], [], []>} : vector<2x16xf32>, vector<16x16xf32>, vector<2x16xf32> -> vector<2x16xf32>
    %62 = vector.broadcast %60 : vector<1x16xf32> to vector<2x16xf32>
    %63 = arith.addf %61, %62 : vector<2x16xf32>
    %cst_43 = arith.constant 0.000000e+00 : f32
    %64 = vector.broadcast %cst_43 : f32 to vector<2x16xf32>
    %65 = arith.maximumf %63, %64 : vector<2x16xf32>
    %c240 = arith.constant 240 : index
    %c0_44 = arith.constant 0 : index
    %66 = vector.load %arg5[%c240, %c0_44] : memref<264x16xf32, #tpu.memory_space<vmem>>, vector<16x1xf32>
    %c256 = arith.constant 256 : index
    %c0_45 = arith.constant 0 : index
    %67 = vector.load %arg5[%c256, %c0_45] : memref<264x16xf32, #tpu.memory_space<vmem>>, vector<1x1xf32>
    %cst_46 = arith.constant dense<0.000000e+00> : vector<2x1xf32>
    %68 = tpu.matmul %65, %66, %cst_46 {dimension_numbers = #tpu.dot_dimension_numbers<[1], [0], [0], [1], [0, 0, 1, 1], [], []>} : vector<2x16xf32>, vector<16x1xf32>, vector<2x1xf32> -> vector<2x1xf32>
    %69 = vector.broadcast %67 : vector<1x1xf32> to vector<2x1xf32>
    %70 = arith.addf %68, %69 : vector<2x1xf32>
    %c0_47 = arith.constant 0 : index
    %c0_48 = arith.constant 0 : index
    %71 = vector.load %arg6[%c0_47, %c0_48] : memref<2x1xf32, #tpu.memory_space<vmem>>, vector<2x1xf32>
    tpu.vector_store %arg6[%c0_47, %c0_48], %70 {strides = array<i32>} : memref<2x1xf32, #tpu.memory_space<vmem>>, vector<2x1xf32>,
    return
  }
  func.func @transform_0(%arg0: i32) -> (i32, i32) {
    %c0_i32 = arith.constant 0 : i32
    %c0_i32_0 = arith.constant 0 : i32
    %c0_i32_1 = arith.constant 0 : i32
    return %c0_i32, %c0_i32_0 : i32, i32
  }
  func.func @transform_1(%arg0: i32) -> (i32, i32) {
    %c0_i32 = arith.constant 0 : i32
    %c0_i32_0 = arith.constant 0 : i32
    %c0_i32_1 = arith.constant 0 : i32
    return %c0_i32, %c0_i32_0 : i32, i32
  }
  func.func @transform_2(%arg0: i32) -> (i32, i32) {
    %c0_i32 = arith.constant 0 : i32
    %c0_i32_0 = arith.constant 0 : i32
    %c0_i32_1 = arith.constant 0 : i32
    return %c0_i32, %c0_i32_0 : i32, i32
  }
  func.func @transform_3(%arg0: i32) -> (i32, i32) {
    %c0_i32 = arith.constant 0 : i32
    %c0_i32_0 = arith.constant 0 : i32
    %c0_i32_1 = arith.constant 0 : i32
    return %c0_i32, %c0_i32_0 : i32, i32
  }
  func.func @transform_4(%arg0: i32) -> (i32, i32) {
    %c0_i32 = arith.constant 0 : i32
    %c0_i32_0 = arith.constant 0 : i32
    %c0_i32_1 = arith.constant 0 : i32
    return %c0_i32, %c0_i32_0 : i32, i32
  }
  func.func @transform_5(%arg0: i32) -> (i32, i32) {
    %c0_i32 = arith.constant 0 : i32
    %c0_i32_0 = arith.constant 0 : i32
    %c0_i32_1 = arith.constant 0 : i32
    return %c0_i32, %c0_i32_0 : i32, i32
  }
}

</mosaic_0001>

<llo_original>
// kernel: mul.1
$region0: #{mul.1}
  #allocation0 [shape = 's32[1]{0}', space=sflag, size = 0x4, scoped, tag = 'scoped memory for mul.1']
  %s0 = inlined_call_operand.vmem [shape: f32[24], index: 0, kind: input, shape index: {}]
  %s1 = inlined_call_operand.vmem [shape: f32[24], index: 1, kind: input, shape index: {}]
  %s2 = inlined_call_operand.vmem [shape: f32[24], index: 2, kind: output, shape index: {}]
  %v3 = vld [vmem:[%s0] sm:$0x1]
  %v4 = vld [vmem:[%s1] sm:$0x1]
  %5 = xla_tuple %v3, %v4
  %6 = xla_tuple %5
  %v7 = vmul.f32 %v3, %v4
  %8 = xla_tuple %v7
  %9 = vst [vmem:[%s2] sm:$0x1] %v7

// kernel: tagconv_model_forward.1
$region0: #{tagconv_model_forward.1}
  #allocation0 [shape = 'u32[]', space=smem, size = 0x4, offset = 0x4, fixed_abs, tag = 'smem constant byte address 0x4 - core index']
  #allocation1 [shape = 'u32[144,128]{1,0:T(1,128)}', space=vmem, size = 0x12000, scoped, tag = 'internal scratch']
  %s0 = inlined_call_operand.vmem [shape: f32[12,16], index: 0, kind: input, shape index: {}]
  %s1 = inlined_call_operand.vmem [shape: f32[12,12], index: 1, kind: input, shape index: {}]
  %s2 = inlined_call_operand.vmem [shape: f32[2,12], index: 2, kind: input, shape index: {}]
  %s3 = inlined_call_operand.vmem [shape: f32[2,8], index: 3, kind: input, shape index: {}]
  %s4 = inlined_call_operand.vmem [shape: f32[264,16], index: 4, kind: input, shape index: {}]
  %s5 = inlined_call_operand.vmem [shape: f32[2,1], index: 5, kind: output, shape index: {}]
  %s6 = sld [smem:[#allocation0]]
  $region30: #{tagconv_model_forward.1} parent=0
    _
  %s8 = ssub.s32 1, %s6
  %s9 = scalar_select 0, %s8, %s6
  // Predicated region
  $region2: #{tagconv_model_forward.1} parent=0 // pred_check
    _
  $region3: #{tagconv_model_forward.1} parent=0 // pred_check_branch
    %11 = sbr.rel (0) target = $region5
  $region4: #{tagconv_model_forward.1} parent=0 // pred_region
    _
  $region5: #{tagconv_model_forward.1} parent=0 // pred_fallthru
    _
  // Predicated region
  $region6: #{tagconv_model_forward.1} parent=0 // pred_check
    _
  $region7: #{tagconv_model_forward.1} parent=0 // pred_check_branch
    %13 = sbr.rel (0) target = $region9
  $region8: #{tagconv_model_forward.1} parent=0 // pred_region
    _
  $region9: #{tagconv_model_forward.1} parent=0 // pred_fallthru
    _
  // Predicated region
  $region10: #{tagconv_model_forward.1} parent=0 // pred_check
    _
  $region11: #{tagconv_model_forward.1} parent=0 // pred_check_branch
    %15 = sbr.rel (0) target = $region13
  $region12: #{tagconv_model_forward.1} parent=0 // pred_region
    _
  $region13: #{tagconv_model_forward.1} parent=0 // pred_fallthru
    _
  // Predicated region
  $region14: #{tagconv_model_forward.1} parent=0 // pred_check
    _
  $region15: #{tagconv_model_forward.1} parent=0 // pred_check_branch
    %17 = sbr.rel (0) target = $region17
  $region16: #{tagconv_model_forward.1} parent=0 // pred_region
    _
  $region17: #{tagconv_model_forward.1} parent=0 // pred_fallthru
    _
  // Predicated region
  $region18: #{tagconv_model_forward.1} parent=0 // pred_check
    _
  $region19: #{tagconv_model_forward.1} parent=0 // pred_check_branch
    %19 = sbr.rel (0) target = $region21
  $region20: #{tagconv_model_forward.1} parent=0 // pred_region
    _
  $region21: #{tagconv_model_forward.1} parent=0 // pred_fallthru
    _
  %v20 = vld [vmem:[%s1] sm:$0xff]
  %v21 = vld [vmem:[%s1 + $0x8] sm:$0xf]
  %v22 = vld [vmem:[%s0] sm:$0xff]
  %v23 = vld [vmem:[%s0 + $0x8] sm:$0xf]
  %vm24 = vcmask 97280
  %v26 = vsel %vm24, %v20, 0
  %v29 = vsel %vm24, %v21, 0
  %vm31 = vcmask 1043456
  %v33 = vsel %vm31, %v23, 0
  %35 = vmatprep.subr.mxu0 0.0
  %36 = vmatpush1.msra.mxu0 %v22
  %37 = vmatprep.subr.mxu0 0.0
  %38 = vmatpush1.msra.mxu0 %v33
  %39 = vmatprep.subr.mxu0 0.0
  %40 = vmatpush1.msra.mxu0 0.0
  %41 = vmatprep.subr.mxu0 0.0
  %42 = vmatpush1.msra.mxu0 0.0
  %43 = vmatprep.subr.mxu0 0.0
  %44 = vmatpush1.msra.mxu0 0.0
  %45 = vmatprep.subr.mxu0 0.0
  %46 = vmatpush1.msra.mxu0 0.0
  %47 = vmatprep.subr.mxu0 0.0
  %48 = vmatpush1.msra.mxu0 0.0
  %49 = vmatprep.subr.mxu0 0.0
  %50 = vmatpush1.msra.mxu0 0.0
  %51 = vmatprep.subr.mxu0 0.0
  %52 = vmatpush1.msra.mxu0 0.0
  %53 = vmatprep.subr.mxu0 0.0
  %54 = vmatpush1.msra.mxu0 0.0
  %55 = vmatprep.subr.mxu0 0.0
  %56 = vmatpush1.msra.mxu0 0.0
  %57 = vmatprep.subr.mxu0 0.0
  %58 = vmatpush1.msra.mxu0 0.0
  %59 = vmatprep.subr.mxu0 0.0
  %60 = vmatpush1.msra.mxu0 0.0
  %61 = vmatprep.subr.mxu0 0.0
  %62 = vmatpush1.msra.mxu0 0.0
  %63 = vmatprep.subr.mxu0 0.0
  %64 = vmatpush1.msra.mxu0 0.0
  %65 = vmatprep.subr.mxu0 0.0
  %66 = vmatpush1.msra.mxu0 0.0
  %67 = vmatprep.subr.mxu0 0.0
  %68 = vmatpush1.msra.mxu0 0.0
  %69 = vmatprep.subr.mxu0 0.0
  %70 = vmatpush1.msra.mxu0 0.0
  %71 = vmatprep.subr.mxu0 0.0
  %72 = vmatpush1.msra.mxu0 0.0
  %73 = vmatprep.subr.mxu0 0.0
  %74 = vmatpush1.msra.mxu0 0.0
  %75 = vmatprep.subr.mxu0 0.0
  %76 = vmatpush1.msra.mxu0 0.0
  %77 = vmatprep.subr.mxu0 0.0
  %78 = vmatpush1.msra.mxu0 0.0
  %79 = vmatprep.subr.mxu0 0.0
  %80 = vmatpush1.msra.mxu0 0.0
  %81 = vmatprep.subr.mxu0 0.0
  %82 = vmatpush1.msra.mxu0 0.0
  %83 = vmatprep.subr.mxu0 0.0
  %84 = vmatpush1.msra.mxu0 0.0
  %85 = vmatprep.subr.mxu0 0.0
  %86 = vmatpush1.msra.mxu0 0.0
  %87 = vmatprep.subr.mxu0 0.0
  %88 = vmatpush1.msra.mxu0 0.0
  %89 = vmatprep.subr.mxu0 0.0
  %90 = vmatpush1.msra.mxu0 0.0
  %91 = vmatprep.subr.mxu0 0.0
  %92 = vmatpush1.msra.mxu0 0.0
  %93 = vmatprep.subr.mxu0 0.0
  %94 = vmatpush1.msra.mxu0 0.0
  %95 = vmatprep.subr.mxu0 0.0
  %96 = vmatpush1.msra.mxu0 0.0
  %97 = vmatprep.subr.mxu0 0.0
  %98 = vmatpush1.msra.mxu0 0.0
  %99 = vmatprep.mubr.f32.mxu0 0.0
  %100 = vmatmul.mubr.f32.gmra.mrb[0].mxu0 %v26
  %v101 = vpop.f32.mrb[0].mxu0
  %v102 = vadd.f32 0.0, %v101
  %v103 = vpop.f32.mrb[0].mxu0
  %104 = vmatprep.mubr.f32.mxu0 0.0
  %105 = vmatmul.mubr.f32.gmra.mrb[0].mxu0 %v29
  %v106 = vpop.f32.mrb[0].mxu0
  %v107 = vadd.f32 0.0, %v106
  %v108 = vpop.f32.mrb[0].mxu0
  %109 = vdwg.mxu0
  %v111 = vsel %vm31, %v107, 0
  %113 = vmatprep.subr.mxu0 0.0
  %114 = vmatpush1.msra.mxu0 %v102
  %115 = vmatprep.subr.mxu0 0.0
  %116 = vmatpush1.msra.mxu0 %v111
  %117 = vmatprep.subr.mxu0 0.0
  %118 = vmatpush1.msra.mxu0 0.0
  %119 = vmatprep.subr.mxu0 0.0
  %120 = vmatpush1.msra.mxu0 0.0
  %121 = vmatprep.subr.mxu0 0.0
  %122 = vmatpush1.msra.mxu0 0.0
  %123 = vmatprep.subr.mxu0 0.0
  %124 = vmatpush1.msra.mxu0 0.0
  %125 = vmatprep.subr.mxu0 0.0
  %126 = vmatpush1.msra.mxu0 0.0
  %127 = vmatprep.subr.mxu0 0.0
  %128 = vmatpush1.msra.mxu0 0.0
  %129 = vmatprep.subr.mxu0 0.0
  %130 = vmatpush1.msra.mxu0 0.0
  %131 = vmatprep.subr.mxu0 0.0
  %132 = vmatpush1.msra.mxu0 0.0
  %133 = vmatprep.subr.mxu0 0.0
  %134 = vmatpush1.msra.mxu0 0.0
  %135 = vmatprep.subr.mxu0 0.0
  %136 = vmatpush1.msra.mxu0 0.0
  %137 = vmatprep.subr.mxu0 0.0
  %138 = vmatpush1.msra.mxu0 0.0
  %139 = vmatprep.subr.mxu0 0.0
  %140 = vmatpush1.msra.mxu0 0.0
  %141 = vmatprep.subr.mxu0 0.0
  %142 = vmatpush1.msra.mxu0 0.0
  %143 = vmatprep.subr.mxu0 0.0
  %144 = vmatpush1.msra.mxu0 0.0
  %145 = vmatprep.subr.mxu0 0.0
  %146 = vmatpush1.msra.mxu0 0.0
  %147 = vmatprep.subr.mxu0 0.0
  %148 = vmatpush1.msra.mxu0 0.0
  %149 = vmatprep.subr.mxu0 0.0
  %150 = vmatpush1.msra.mxu0 0.0
  %151 = vmatprep.subr.mxu0 0.0
  %152 = vmatpush1.msra.mxu0 0.0
  %153 = vmatprep.subr.mxu0 0.0
  %154 = vmatpush1.msra.mxu0 0.0
  %155 = vmatprep.subr.mxu0 0.0
  %156 = vmatpush1.msra.mxu0 0.0
  %157 = vmatprep.subr.mxu0 0.0
  %158 = vmatpush1.msra.mxu0 0.0
  %159 = vmatprep.subr.mxu0 0.0
  %160 = vmatpush1.msra.mxu0 0.0
  %161 = vmatprep.subr.mxu0 0.0
  %162 = vmatpush1.msra.mxu0 0.0
  %163 = vmatprep.subr.mxu0 0.0
  %164 = vmatpush1.msra.mxu0 0.0
  %165 = vmatprep.subr.mxu0 0.0
  %166 = vmatpush1.msra.mxu0 0.0
  %167 = vmatprep.subr.mxu0 0.0
  %168 = vmatpush1.msra.mxu0 0.0
  %169 = vmatprep.subr.mxu0 0.0
  %170 = vmatpush1.msra.mxu0 0.0
  %171 = vmatprep.subr.mxu0 0.0
  %172 = vmatpush1.msra.mxu0 0.0
  %173 = vmatprep.subr.mxu0 0.0
  %174 = vmatpush1.msra.mxu0 0.0
  %175 = vmatprep.subr.mxu0 0.0
  %176 = vmatpush1.msra.mxu0 0.0
  %177 = vmatprep.mubr.f32.mxu0 0.0
  %178 = vmatmul.mubr.f32.gmra.mrb[0].mxu0 %v26
  %v179 = vpop.f32.mrb[0].mxu0
  %v180 = vadd.f32 0.0, %v179
  %v181 = vpop.f32.mrb[0].mxu0
  %182 = vmatprep.mubr.f32.mxu0 0.0
  %183 = vmatmul.mubr.f32.gmra.mrb[0].mxu0 %v29
  %v184 = vpop.f32.mrb[0].mxu0
  %v185 = vadd.f32 0.0, %v184
  %v186 = vpop.f32.mrb[0].mxu0
  %187 = vdwg.mxu0
  %v189 = vsel %vm31, %v185, 0
  %191 = vmatprep.subr.mxu0 0.0
  %192 = vmatpush1.msra.mxu0 %v180
  %193 = vmatprep.subr.mxu0 0.0
  %194 = vmatpush1.msra.mxu0 %v189
  %195 = vmatprep.subr.mxu0 0.0
  %196 = vmatpush1.msra.mxu0 0.0
  %197 = vmatprep.subr.mxu0 0.0
  %198 = vmatpush1.msra.mxu0 0.0
  %199 = vmatprep.subr.mxu0 0.0
  %200 = vmatpush1.msra.mxu0 0.0
  %201 = vmatprep.subr.mxu0 0.0
  %202 = vmatpush1.msra.mxu0 0.0
  %203 = vmatprep.subr.mxu0 0.0
  %204 = vmatpush1.msra.mxu0 0.0
  %205 = vmatprep.subr.mxu0 0.0
  %206 = vmatpush1.msra.mxu0 0.0
  %207 = vmatprep.subr.mxu0 0.0
  %208 = vmatpush1.msra.mxu0 0.0
  %209 = vmatprep.subr.mxu0 0.0
  %210 = vmatpush1.msra.mxu0 0.0
  %211 = vmatprep.subr.mxu0 0.0
  %212 = vmatpush1.msra.mxu0 0.0
  %213 = vmatprep.subr.mxu0 0.0
  %214 = vmatpush1.msra.mxu0 0.0
  %215 = vmatprep.subr.mxu0 0.0
  %216 = vmatpush1.msra.mxu0 0.0
  %217 = vmatprep.subr.mxu0 0.0
  %218 = vmatpush1.msra.mxu0 0.0
  %219 = vmatprep.subr.mxu0 0.0
  %220 = vmatpush1.msra.mxu0 0.0
  %221 = vmatprep.subr.mxu0 0.0
  %222 = vmatpush1.msra.mxu0 0.0
  %223 = vmatprep.subr.mxu0 0.0
  %224 = vmatpush1.msra.mxu0 0.0
  %225 = vmatprep.subr.mxu0 0.0
  %226 = vmatpush1.msra.mxu0 0.0
  %227 = vmatprep.subr.mxu0 0.0
  %228 = vmatpush1.msra.mxu0 0.0
  %229 = vmatprep.subr.mxu0 0.0
  %230 = vmatpush1.msra.mxu0 0.0
  %231 = vmatprep.subr.mxu0 0.0
  %232 = vmatpush1.msra.mxu0 0.0
  %233 = vmatprep.subr.mxu0 0.0
  %234 = vmatpush1.msra.mxu0 0.0
  %235 = vmatprep.subr.mxu0 0.0
  %236 = vmatpush1.msra.mxu0 0.0
  %237 = vmatprep.subr.mxu0 0.0
  %238 = vmatpush1.msra.mxu0 0.0
  %239 = vmatprep.subr.mxu0 0.0
  %240 = vmatpush1.msra.mxu0 0.0
  %241 = vmatprep.subr.mxu0 0.0
  %242 = vmatpush1.msra.mxu0 0.0
  %243 = vmatprep.subr.mxu0 0.0
  %244 = vmatpush1.msra.mxu0 0.0
  %245 = vmatprep.subr.mxu0 0.0
  %246 = vmatpush1.msra.mxu0 0.0
  %247 = vmatprep.subr.mxu0 0.0
  %248 = vmatpush1.msra.mxu0 0.0
  %249 = vmatprep.subr.mxu0 0.0
  %250 = vmatpush1.msra.mxu0 0.0
  %251 = vmatprep.subr.mxu0 0.0
  %252 = vmatpush1.msra.mxu0 0.0
  %253 = vmatprep.subr.mxu0 0.0
  %254 = vmatpush1.msra.mxu0 0.0
  %255 = vmatprep.mubr.f32.mxu0 0.0
  %256 = vmatmul.mubr.f32.gmra.mrb[0].mxu0 %v26
  %v257 = vpop.f32.mrb[0].mxu0
  %v258 = vadd.f32 0.0, %v257
  %v259 = vpop.f32.mrb[0].mxu0
  %260 = vmatprep.mubr.f32.mxu0 0.0
  %261 = vmatmul.mubr.f32.gmra.mrb[0].mxu0 %v29
  %v262 = vpop.f32.mrb[0].mxu0
  %v263 = vadd.f32 0.0, %v262
  %v264 = vpop.f32.mrb[0].mxu0
  %265 = vdwg.mxu0
  %267 = vrot.lane.b32.xlu0 %v102, 16
  %v268 = vpop.permute.xlu0 %267
  %269 = vrot.lane.b32.xlu0 %v107, 16
  %v270 = vpop.permute.xlu0 %269
  %274 = vrot.lane.b32.xlu0 %v180, 32
  %v275 = vpop.permute.xlu0 %274
  %276 = vrot.lane.b32.xlu0 %v185, 32
  %v277 = vpop.permute.xlu0 %276
  %282 = vrot.lane.b32.xlu0 %v258, 48
  %v283 = vpop.permute.xlu0 %282
  %284 = vrot.lane.b32.xlu0 %v263, 48
  %v285 = vpop.permute.xlu0 %284
  %vm288 = vcmask 130048
  %v289 = vsel %vm288, %v22, %v268
  %v290 = vsel %vm288, %v23, %v270
  %vm291 = vcmask 261120
  %v292 = vsel %vm291, %v289, %v275
  %v293 = vsel %vm291, %v290, %v277
  %vm294 = vcmask 392192
  %v295 = vsel %vm294, %v292, %v283
  %v296 = vsel %vm294, %v293, %v285
  %v297 = vld [vmem:[%s4] sm:$0xff]
  %v298 = vld [vmem:[%s4 + $0x8] sm:$0xff]
  %v299 = vld [vmem:[%s4 + $0x10] sm:$0xff]
  %v300 = vld [vmem:[%s4 + $0x18] sm:$0xff]
  %v301 = vld [vmem:[%s4 + $0x20] sm:$0xff]
  %v302 = vld [vmem:[%s4 + $0x28] sm:$0xff]
  %v303 = vld [vmem:[%s4 + $0x30] sm:$0xff]
  %v304 = vld [vmem:[%s4 + $0x38] sm:$0xff]
  %v305 = vld [vmem:[%s4 + $0x40] sm:$0x1]
  %v306 = vlaneseq
  %v307 = vshrl.u32 %v306, 7
  %v308 = vsub.s32 0, %v307
  %v309 = vrot.slane %v305, %v308
  %vm310 = vcmask 523264
  %v312 = vsel %vm310, %v295, 0
  %v315 = vsel %vm310, %v296, 0
  %317 = vmatprep.subr.mxu0 0.0
  %318 = vmatpush1.msra.mxu0 %v297
  %319 = vmatprep.subr.mxu0 0.0
  %320 = vmatpush1.msra.mxu0 %v298
  %321 = vmatprep.subr.mxu0 0.0
  %322 = vmatpush1.msra.mxu0 %v299
  %323 = vmatprep.subr.mxu0 0.0
  %324 = vmatpush1.msra.mxu0 %v300
  %325 = vmatprep.subr.mxu0 0.0
  %326 = vmatpush1.msra.mxu0 %v301
  %327 = vmatprep.subr.mxu0 0.0
  %328 = vmatpush1.msra.mxu0 %v302
  %329 = vmatprep.subr.mxu0 0.0
  %330 = vmatpush1.msra.mxu0 %v303
  %331 = vmatprep.subr.mxu0 0.0
  %332 = vmatpush1.msra.mxu0 %v304
  %333 = vmatprep.subr.mxu0 0.0
  %334 = vmatpush1.msra.mxu0 0.0
  %335 = vmatprep.subr.mxu0 0.0
  %336 = vmatpush1.msra.mxu0 0.0
  %337 = vmatprep.subr.mxu0 0.0
  %338 = vmatpush1.msra.mxu0 0.0
  %339 = vmatprep.subr.mxu0 0.0
  %340 = vmatpush1.msra.mxu0 0.0
  %341 = vmatprep.subr.mxu0 0.0
  %342 = vmatpush1.msra.mxu0 0.0
  %343 = vmatprep.subr.mxu0 0.0
  %344 = vmatpush1.msra.mxu0 0.0
  %345 = vmatprep.subr.mxu0 0.0
  %346 = vmatpush1.msra.mxu0 0.0
  %347 = vmatprep.subr.mxu0 0.0
  %348 = vmatpush1.msra.mxu0 0.0
  %349 = vmatprep.subr.mxu0 0.0
  %350 = vmatpush1.msra.mxu0 0.0
  %351 = vmatprep.subr.mxu0 0.0
  %352 = vmatpush1.msra.mxu0 0.0
  %353 = vmatprep.subr.mxu0 0.0
  %354 = vmatpush1.msra.mxu0 0.0
  %355 = vmatprep.subr.mxu0 0.0
  %356 = vmatpush1.msra.mxu0 0.0
  %357 = vmatprep.subr.mxu0 0.0
  %358 = vmatpush1.msra.mxu0 0.0
  %359 = vmatprep.subr.mxu0 0.0
  %360 = vmatpush1.msra.mxu0 0.0
  %361 = vmatprep.subr.mxu0 0.0
  %362 = vmatpush1.msra.mxu0 0.0
  %363 = vmatprep.subr.mxu0 0.0
  %364 = vmatpush1.msra.mxu0 0.0
  %365 = vmatprep.subr.mxu0 0.0
  %366 = vmatpush1.msra.mxu0 0.0
  %367 = vmatprep.subr.mxu0 0.0
  %368 = vmatpush1.msra.mxu0 0.0
  %369 = vmatprep.subr.mxu0 0.0
  %370 = vmatpush1.msra.mxu0 0.0
  %371 = vmatprep.subr.mxu0 0.0
  %372 = vmatpush1.msra.mxu0 0.0
  %373 = vmatprep.subr.mxu0 0.0
  %374 = vmatpush1.msra.mxu0 0.0
  %375 = vmatprep.subr.mxu0 0.0
  %376 = vmatpush1.msra.mxu0 0.0
  %377 = vmatprep.subr.mxu0 0.0
  %378 = vmatpush1.msra.mxu0 0.0
  %379 = vmatprep.subr.mxu0 0.0
  %380 = vmatpush1.msra.mxu0 0.0
  %381 = vmatprep.mubr.f32.mxu0 0.0
  %382 = vmatmul.mubr.f32.gmra.mrb[0].mxu0 %v312
  %v383 = vpop.f32.mrb[0].mxu0
  %v384 = vadd.f32 %v309, %v383
  %v385 = vpop.f32.mrb[0].mxu0
  %386 = vmatprep.mubr.f32.mxu0 0.0
  %387 = vmatmul.mubr.f32.gmra.mrb[0].mxu0 %v315
  %v388 = vpop.f32.mrb[0].mxu0
  %v389 = vadd.f32 %v309, %v388
  %v390 = vpop.f32.mrb[0].mxu0
  %391 = vdwg.mxu0
  %v393 = vsel %vm31, %v389, 0
  %395 = vmatprep.subr.mxu0 0.0
  %396 = vmatpush1.msra.mxu0 %v384
  %397 = vmatprep.subr.mxu0 0.0
  %398 = vmatpush1.msra.mxu0 %v393
  %399 = vmatprep.subr.mxu0 0.0
  %400 = vmatpush1.msra.mxu0 0.0
  %401 = vmatprep.subr.mxu0 0.0
  %402 = vmatpush1.msra.mxu0 0.0
  %403 = vmatprep.subr.mxu0 0.0
  %404 = vmatpush1.msra.mxu0 0.0
  %405 = vmatprep.subr.mxu0 0.0
  %406 = vmatpush1.msra.mxu0 0.0
  %407 = vmatprep.subr.mxu0 0.0
  %408 = vmatpush1.msra.mxu0 0.0
  %409 = vmatprep.subr.mxu0 0.0
  %410 = vmatpush1.msra.mxu0 0.0
  %411 = vmatprep.subr.mxu0 0.0
  %412 = vmatpush1.msra.mxu0 0.0
  %413 = vmatprep.subr.mxu0 0.0
  %414 = vmatpush1.msra.mxu0 0.0
  %415 = vmatprep.subr.mxu0 0.0
  %416 = vmatpush1.msra.mxu0 0.0
  %417 = vmatprep.subr.mxu0 0.0
  %418 = vmatpush1.msra.mxu0 0.0
  %419 = vmatprep.subr.mxu0 0.0
  %420 = vmatpush1.msra.mxu0 0.0
  %421 = vmatprep.subr.mxu0 0.0
  %422 = vmatpush1.msra.mxu0 0.0
  %423 = vmatprep.subr.mxu0 0.0
  %424 = vmatpush1.msra.mxu0 0.0
  %425 = vmatprep.subr.mxu0 0.0
  %426 = vmatpush1.msra.mxu0 0.0
  %427 = vmatprep.subr.mxu0 0.0
  %428 = vmatpush1.msra.mxu0 0.0
  %429 = vmatprep.subr.mxu0 0.0
  %430 = vmatpush1.msra.mxu0 0.0
  %431 = vmatprep.subr.mxu0 0.0
  %432 = vmatpush1.msra.mxu0 0.0
  %433 = vmatprep.subr.mxu0 0.0
  %434 = vmatpush1.msra.mxu0 0.0
  %435 = vmatprep.subr.mxu0 0.0
  %436 = vmatpush1.msra.mxu0 0.0
  %437 = vmatprep.subr.mxu0 0.0
  %438 = vmatpush1.msra.mxu0 0.0
  %439 = vmatprep.subr.mxu0 0.0
  %440 = vmatpush1.msra.mxu0 0.0
  %441 = vmatprep.subr.mxu0 0.0
  %442 = vmatpush1.msra.mxu0 0.0
  %443 = vmatprep.subr.mxu0 0.0
  %444 = vmatpush1.msra.mxu0 0.0
  %445 = vmatprep.subr.mxu0 0.0
  %446 = vmatpush1.msra.mxu0 0.0
  %447 = vmatprep.subr.mxu0 0.0
  %448 = vmatpush1.msra.mxu0 0.0
  %449 = vmatprep.subr.mxu0 0.0
  %450 = vmatpush1.msra.mxu0 0.0
  %451 = vmatprep.subr.mxu0 0.0
  %452 = vmatpush1.msra.mxu0 0.0
  %453 = vmatprep.subr.mxu0 0.0
  %454 = vmatpush1.msra.mxu0 0.0
  %455 = vmatprep.subr.mxu0 0.0
  %456 = vmatpush1.msra.mxu0 0.0
  %457 = vmatprep.subr.mxu0 0.0
  %458 = vmatpush1.msra.mxu0 0.0
  %459 = vmatprep.mubr.f32.mxu0 0.0
  %460 = vmatmul.mubr.f32.gmra.mrb[0].mxu0 %v26
  %v461 = vpop.f32.mrb[0].mxu0
  %v462 = vadd.f32 0.0, %v461
  %v463 = vpop.f32.mrb[0].mxu0
  %464 = vmatprep.mubr.f32.mxu0 0.0
  %465 = vmatmul.mubr.f32.gmra.mrb[0].mxu0 %v29
  %v466 = vpop.f32.mrb[0].mxu0
  %v467 = vadd.f32 0.0, %v466
  %v468 = vpop.f32.mrb[0].mxu0
  %469 = vdwg.mxu0
  %v471 = vsel %vm31, %v467, 0
  %473 = vmatprep.subr.mxu0 0.0
  %474 = vmatpush1.msra.mxu0 %v462
  %475 = vmatprep.subr.mxu0 0.0
  %476 = vmatpush1.msra.mxu0 %v471
  %477 = vmatprep.subr.mxu0 0.0
  %478 = vmatpush1.msra.mxu0 0.0
  %479 = vmatprep.subr.mxu0 0.0
  %480 = vmatpush1.msra.mxu0 0.0
  %481 = vmatprep.subr.mxu0 0.0
  %482 = vmatpush1.msra.mxu0 0.0
  %483 = vmatprep.subr.mxu0 0.0
  %484 = vmatpush1.msra.mxu0 0.0
  %485 = vmatprep.subr.mxu0 0.0
  %486 = vmatpush1.msra.mxu0 0.0
  %487 = vmatprep.subr.mxu0 0.0
  %488 = vmatpush1.msra.mxu0 0.0
  %489 = vmatprep.subr.mxu0 0.0
  %490 = vmatpush1.msra.mxu0 0.0
  %491 = vmatprep.subr.mxu0 0.0
  %492 = vmatpush1.msra.mxu0 0.0
  %493 = vmatprep.subr.mxu0 0.0
  %494 = vmatpush1.msra.mxu0 0.0
  %495 = vmatprep.subr.mxu0 0.0
  %496 = vmatpush1.msra.mxu0 0.0
  %497 = vmatprep.subr.mxu0 0.0
  %498 = vmatpush1.msra.mxu0 0.0
  %499 = vmatprep.subr.mxu0 0.0
  %500 = vmatpush1.msra.mxu0 0.0
  %501 = vmatprep.subr.mxu0 0.0
  %502 = vmatpush1.msra.mxu0 0.0
  %503 = vmatprep.subr.mxu0 0.0
  %504 = vmatpush1.msra.mxu0 0.0
  %505 = vmatprep.subr.mxu0 0.0
  %506 = vmatpush1.msra.mxu0 0.0
  %507 = vmatprep.subr.mxu0 0.0
  %508 = vmatpush1.msra.mxu0 0.0
  %509 = vmatprep.subr.mxu0 0.0
  %510 = vmatpush1.msra.mxu0 0.0
  %511 = vmatprep.subr.mxu0 0.0
  %512 = vmatpush1.msra.mxu0 0.0
  %513 = vmatprep.subr.mxu0 0.0
  %514 = vmatpush1.msra.mxu0 0.0
  %515 = vmatprep.subr.mxu0 0.0
  %516 = vmatpush1.msra.mxu0 0.0
  %517 = vmatprep.subr.mxu0 0.0
  %518 = vmatpush1.msra.mxu0 0.0
  %519 = vmatprep.subr.mxu0 0.0
  %520 = vmatpush1.msra.mxu0 0.0
  %521 = vmatprep.subr.mxu0 0.0
  %522 = vmatpush1.msra.mxu0 0.0
  %523 = vmatprep.subr.mxu0 0.0
  %524 = vmatpush1.msra.mxu0 0.0
  %525 = vmatprep.subr.mxu0 0.0
  %526 = vmatpush1.msra.mxu0 0.0
  %527 = vmatprep.subr.mxu0 0.0
  %528 = vmatpush1.msra.mxu0 0.0
  %529 = vmatprep.subr.mxu0 0.0
  %530 = vmatpush1.msra.mxu0 0.0
  %531 = vmatprep.subr.mxu0 0.0
  %532 = vmatpush1.msra.mxu0 0.0
  %533 = vmatprep.subr.mxu0 0.0
  %534 = vmatpush1.msra.mxu0 0.0
  %535 = vmatprep.subr.mxu0 0.0
  %536 = vmatpush1.msra.mxu0 0.0
  %537 = vmatprep.mubr.f32.mxu0 0.0
  %538 = vmatmul.mubr.f32.gmra.mrb[0].mxu0 %v26
  %v539 = vpop.f32.mrb[0].mxu0
  %v540 = vadd.f32 0.0, %v539
  %v541 = vpop.f32.mrb[0].mxu0
  %542 = vmatprep.mubr.f32.mxu0 0.0
  %543 = vmatmul.mubr.f32.gmra.mrb[0].mxu0 %v29
  %v544 = vpop.f32.mrb[0].mxu0
  %v545 = vadd.f32 0.0, %v544
  %v546 = vpop.f32.mrb[0].mxu0
  %547 = vdwg.mxu0
  %v549 = vsel %vm31, %v545, 0
  %551 = vmatprep.subr.mxu0 0.0
  %552 = vmatpush1.msra.mxu0 %v540
  %553 = vmatprep.subr.mxu0 0.0
  %554 = vmatpush1.msra.mxu0 %v549
  %555 = vmatprep.subr.mxu0 0.0
  %556 = vmatpush1.msra.mxu0 0.0
  %557 = vmatprep.subr.mxu0 0.0
  %558 = vmatpush1.msra.mxu0 0.0
  %559 = vmatprep.subr.mxu0 0.0
  %560 = vmatpush1.msra.mxu0 0.0
  %561 = vmatprep.subr.mxu0 0.0
  %562 = vmatpush1.msra.mxu0 0.0
  %563 = vmatprep.subr.mxu0 0.0
  %564 = vmatpush1.msra.mxu0 0.0
  %565 = vmatprep.subr.mxu0 0.0
  %566 = vmatpush1.msra.mxu0 0.0
  %567 = vmatprep.subr.mxu0 0.0
  %568 = vmatpush1.msra.mxu0 0.0
  %569 = vmatprep.subr.mxu0 0.0
  %570 = vmatpush1.msra.mxu0 0.0
  %571 = vmatprep.subr.mxu0 0.0
  %572 = vmatpush1.msra.mxu0 0.0
  %573 = vmatprep.subr.mxu0 0.0
  %574 = vmatpush1.msra.mxu0 0.0
  %575 = vmatprep.subr.mxu0 0.0
  %576 = vmatpush1.msra.mxu0 0.0
  %577 = vmatprep.subr.mxu0 0.0
  %578 = vmatpush1.msra.mxu0 0.0
  %579 = vmatprep.subr.mxu0 0.0
  %580 = vmatpush1.msra.mxu0 0.0
  %581 = vmatprep.subr.mxu0 0.0
  %582 = vmatpush1.msra.mxu0 0.0
  %583 = vmatprep.subr.mxu0 0.0
  %584 = vmatpush1.msra.mxu0 0.0
  %585 = vmatprep.subr.mxu0 0.0
  %586 = vmatpush1.msra.mxu0 0.0
  %587 = vmatprep.subr.mxu0 0.0
  %588 = vmatpush1.msra.mxu0 0.0
  %589 = vmatprep.subr.mxu0 0.0
  %590 = vmatpush1.msra.mxu0 0.0
  %591 = vmatprep.subr.mxu0 0.0
  %592 = vmatpush1.msra.mxu0 0.0
  %593 = vmatprep.subr.mxu0 0.0
  %594 = vmatpush1.msra.mxu0 0.0
  %595 = vmatprep.subr.mxu0 0.0
  %596 = vmatpush1.msra.mxu0 0.0
  %597 = vmatprep.subr.mxu0 0.0
  %598 = vmatpush1.msra.mxu0 0.0
  %599 = vmatprep.subr.mxu0 0.0
  %600 = vmatpush1.msra.mxu0 0.0
  %601 = vmatprep.subr.mxu0 0.0
  %602 = vmatpush1.msra.mxu0 0.0
  %603 = vmatprep.subr.mxu0 0.0
  %604 = vmatpush1.msra.mxu0 0.0
  %605 = vmatprep.subr.mxu0 0.0
  %606 = vmatpush1.msra.mxu0 0.0
  %607 = vmatprep.subr.mxu0 0.0
  %608 = vmatpush1.msra.mxu0 0.0
  %609 = vmatprep.subr.mxu0 0.0
  %610 = vmatpush1.msra.mxu0 0.0
  %611 = vmatprep.subr.mxu0 0.0
  %612 = vmatpush1.msra.mxu0 0.0
  %613 = vmatprep.subr.mxu0 0.0
  %614 = vmatpush1.msra.mxu0 0.0
  %615 = vmatprep.mubr.f32.mxu0 0.0
  %616 = vmatmul.mubr.f32.gmra.mrb[0].mxu0 %v26
  %v617 = vpop.f32.mrb[0].mxu0
  %v618 = vadd.f32 0.0, %v617
  %v619 = vpop.f32.mrb[0].mxu0
  %620 = vmatprep.mubr.f32.mxu0 0.0
  %621 = vmatmul.mubr.f32.gmra.mrb[0].mxu0 %v29
  %v622 = vpop.f32.mrb[0].mxu0
  %v623 = vadd.f32 0.0, %v622
  %v624 = vpop.f32.mrb[0].mxu0
  %625 = vdwg.mxu0
  %627 = vrot.lane.b32.xlu0 %v462, 8
  %v628 = vpop.permute.xlu0 %627
  %629 = vrot.lane.b32.xlu0 %v467, 8
  %v630 = vpop.permute.xlu0 %629
  %634 = vrot.lane.b32.xlu0 %v540, 16
  %v635 = vpop.permute.xlu0 %634
  %636 = vrot.lane.b32.xlu0 %v545, 16
  %v637 = vpop.permute.xlu0 %636
  %642 = vrot.lane.b32.xlu0 %v618, 24
  %v643 = vpop.permute.xlu0 %642
  %644 = vrot.lane.b32.xlu0 %v623, 24
  %v645 = vpop.permute.xlu0 %644
  %vm648 = vcmask 64512
  %v649 = vsel %vm648, %v384, %v628
  %v650 = vsel %vm648, %v389, %v630
  %v651 = vsel %vm288, %v649, %v635
  %v652 = vsel %vm288, %v650, %v637
  %vm653 = vcmask 195584
  %v654 = vsel %vm653, %v651, %v643
  %v655 = vsel %vm653, %v652, %v645
  %v656 = vld [vmem:[%s4 + $0x48] sm:$0xff]
  %v657 = vld [vmem:[%s4 + $0x50] sm:$0xff]
  %v658 = vld [vmem:[%s4 + $0x58] sm:$0xff]
  %v659 = vld [vmem:[%s4 + $0x60] sm:$0xff]
  %v660 = vld [vmem:[%s4 + $0x68] sm:$0x1]
  %v661 = vlaneseq
  %v662 = vshrl.u32 %v661, 7
  %v663 = vsub.s32 0, %v662
  %v664 = vrot.slane %v660, %v663
  %v666 = vsel %vm291, %v654, 0
  %v669 = vsel %vm291, %v655, 0
  %671 = vmatprep.subr.mxu0 0.0
  %672 = vmatpush1.msra.mxu0 %v656
  %673 = vmatprep.subr.mxu0 0.0
  %674 = vmatpush1.msra.mxu0 %v657
  %675 = vmatprep.subr.mxu0 0.0
  %676 = vmatpush1.msra.mxu0 %v658
  %677 = vmatprep.subr.mxu0 0.0
  %678 = vmatpush1.msra.mxu0 %v659
  %679 = vmatprep.subr.mxu0 0.0
  %680 = vmatpush1.msra.mxu0 0.0
  %681 = vmatprep.subr.mxu0 0.0
  %682 = vmatpush1.msra.mxu0 0.0
  %683 = vmatprep.subr.mxu0 0.0
  %684 = vmatpush1.msra.mxu0 0.0
  %685 = vmatprep.subr.mxu0 0.0
  %686 = vmatpush1.msra.mxu0 0.0
  %687 = vmatprep.subr.mxu0 0.0
  %688 = vmatpush1.msra.mxu0 0.0
  %689 = vmatprep.subr.mxu0 0.0
  %690 = vmatpush1.msra.mxu0 0.0
  %691 = vmatprep.subr.mxu0 0.0
  %692 = vmatpush1.msra.mxu0 0.0
  %693 = vmatprep.subr.mxu0 0.0
  %694 = vmatpush1.msra.mxu0 0.0
  %695 = vmatprep.subr.mxu0 0.0
  %696 = vmatpush1.msra.mxu0 0.0
  %697 = vmatprep.subr.mxu0 0.0
  %698 = vmatpush1.msra.mxu0 0.0
  %699 = vmatprep.subr.mxu0 0.0
  %700 = vmatpush1.msra.mxu0 0.0
  %701 = vmatprep.subr.mxu0 0.0
  %702 = vmatpush1.msra.mxu0 0.0
  %703 = vmatprep.subr.mxu0 0.0
  %704 = vmatpush1.msra.mxu0 0.0
  %705 = vmatprep.subr.mxu0 0.0
  %706 = vmatpush1.msra.mxu0 0.0
  %707 = vmatprep.subr.mxu0 0.0
  %708 = vmatpush1.msra.mxu0 0.0
  %709 = vmatprep.subr.mxu0 0.0
  %710 = vmatpush1.msra.mxu0 0.0
  %711 = vmatprep.subr.mxu0 0.0
  %712 = vmatpush1.msra.mxu0 0.0
  %713 = vmatprep.subr.mxu0 0.0
  %714 = vmatpush1.msra.mxu0 0.0
  %715 = vmatprep.subr.mxu0 0.0
  %716 = vmatpush1.msra.mxu0 0.0
  %717 = vmatprep.subr.mxu0 0.0
  %718 = vmatpush1.msra.mxu0 0.0
  %719 = vmatprep.subr.mxu0 0.0
  %720 = vmatpush1.msra.mxu0 0.0
  %721 = vmatprep.subr.mxu0 0.0
  %722 = vmatpush1.msra.mxu0 0.0
  %723 = vmatprep.subr.mxu0 0.0
  %724 = vmatpush1.msra.mxu0 0.0
  %725 = vmatprep.subr.mxu0 0.0
  %726 = vmatpush1.msra.mxu0 0.0
  %727 = vmatprep.subr.mxu0 0.0
  %728 = vmatpush1.msra.mxu0 0.0
  %729 = vmatprep.subr.mxu0 0.0
  %730 = vmatpush1.msra.mxu0 0.0
  %731 = vmatprep.subr.mxu0 0.0
  %732 = vmatpush1.msra.mxu0 0.0
  %733 = vmatprep.subr.mxu0 0.0
  %734 = vmatpush1.msra.mxu0 0.0
  %735 = vmatprep.mubr.f32.mxu0 0.0
  %736 = vmatmul.mubr.f32.gmra.mrb[0].mxu0 %v666
  %v737 = vpop.f32.mrb[0].mxu0
  %v738 = vadd.f32 %v664, %v737
  %v739 = vpop.f32.mrb[0].mxu0
  %740 = vmatprep.mubr.f32.mxu0 0.0
  %741 = vmatmul.mubr.f32.gmra.mrb[0].mxu0 %v669
  %v742 = vpop.f32.mrb[0].mxu0
  %v743 = vadd.f32 %v664, %v742
  %v744 = vpop.f32.mrb[0].mxu0
  %745 = vdwg.mxu0
  %v746 = vld [vmem:[%s4 + $0x70] sm:$0xff]
  %v747 = vld [vmem:[%s4 + $0x78] sm:$0x1]
  %v748 = vlaneseq
  %v749 = vshrl.u32 %v748, 7
  %v750 = vsub.s32 0, %v749
  %v751 = vrot.slane %v747, %v750
  %v753 = vsel %vm648, %v738, 0
  %v756 = vsel %vm648, %v743, 0
  %758 = vmatprep.subr.mxu0 0.0
  %759 = vmatpush1.msra.mxu0 %v746
  %760 = vmatprep.subr.mxu0 0.0
  %761 = vmatpush1.msra.mxu0 0.0
  %762 = vmatprep.subr.mxu0 0.0
  %763 = vmatpush1.msra.mxu0 0.0
  %764 = vmatprep.subr.mxu0 0.0
  %765 = vmatpush1.msra.mxu0 0.0
  %766 = vmatprep.subr.mxu0 0.0
  %767 = vmatpush1.msra.mxu0 0.0
  %768 = vmatprep.subr.mxu0 0.0
  %769 = vmatpush1.msra.mxu0 0.0
  %770 = vmatprep.subr.mxu0 0.0
  %771 = vmatpush1.msra.mxu0 0.0
  %772 = vmatprep.subr.mxu0 0.0
  %773 = vmatpush1.msra.mxu0 0.0
  %774 = vmatprep.subr.mxu0 0.0
  %775 = vmatpush1.msra.mxu0 0.0
  %776 = vmatprep.subr.mxu0 0.0
  %777 = vmatpush1.msra.mxu0 0.0
  %778 = vmatprep.subr.mxu0 0.0
  %779 = vmatpush1.msra.mxu0 0.0
  %780 = vmatprep.subr.mxu0 0.0
  %781 = vmatpush1.msra.mxu0 0.0
  %782 = vmatprep.subr.mxu0 0.0
  %783 = vmatpush1.msra.mxu0 0.0
  %784 = vmatprep.subr.mxu0 0.0
  %785 = vmatpush1.msra.mxu0 0.0
  %786 = vmatprep.subr.mxu0 0.0
  %787 = vmatpush1.msra.mxu0 0.0
  %788 = vmatprep.subr.mxu0 0.0
  %789 = vmatpush1.msra.mxu0 0.0
  %790 = vmatprep.subr.mxu0 0.0
  %791 = vmatpush1.msra.mxu0 0.0
  %792 = vmatprep.subr.mxu0 0.0
  %793 = vmatpush1.msra.mxu0 0.0
  %794 = vmatprep.subr.mxu0 0.0
  %795 = vmatpush1.msra.mxu0 0.0
  %796 = vmatprep.subr.mxu0 0.0
  %797 = vmatpush1.msra.mxu0 0.0
  %798 = vmatprep.subr.mxu0 0.0
  %799 = vmatpush1.msra.mxu0 0.0
  %800 = vmatprep.subr.mxu0 0.0
  %801 = vmatpush1.msra.mxu0 0.0
  %802 = vmatprep.subr.mxu0 0.0
  %803 = vmatpush1.msra.mxu0 0.0
  %804 = vmatprep.subr.mxu0 0.0
  %805 = vmatpush1.msra.mxu0 0.0
  %806 = vmatprep.subr.mxu0 0.0
  %807 = vmatpush1.msra.mxu0 0.0
  %808 = vmatprep.subr.mxu0 0.0
  %809 = vmatpush1.msra.mxu0 0.0
  %810 = vmatprep.subr.mxu0 0.0
  %811 = vmatpush1.msra.mxu0 0.0
  %812 = vmatprep.subr.mxu0 0.0
  %813 = vmatpush1.msra.mxu0 0.0
  %814 = vmatprep.subr.mxu0 0.0
  %815 = vmatpush1.msra.mxu0 0.0
  %816 = vmatprep.subr.mxu0 0.0
  %817 = vmatpush1.msra.mxu0 0.0
  %818 = vmatprep.subr.mxu0 0.0
  %819 = vmatpush1.msra.mxu0 0.0
  %820 = vmatprep.subr.mxu0 0.0
  %821 = vmatpush1.msra.mxu0 0.0
  %822 = vmatprep.mubr.f32.mxu0 0.0
  %823 = vmatmul.mubr.f32.gmra.mrb[0].mxu0 %v753
  %v824 = vpop.f32.mrb[0].mxu0
  %v825 = vadd.f32 %v751, %v824
  %v826 = vpop.f32.mrb[0].mxu0
  %827 = vmatprep.mubr.f32.mxu0 0.0
  %828 = vmatmul.mubr.f32.gmra.mrb[0].mxu0 %v756
  %v829 = vpop.f32.mrb[0].mxu0
  %v830 = vadd.f32 %v751, %v829
  %v831 = vpop.f32.mrb[0].mxu0
  %832 = vdwg.mxu0
  %v833 = vmax.f32 %v825, 0.0
  %v834 = vmax.f32 %v830, 0.0
  %v835 = vld [vmem:[%s2] sm:$0x3]
  %v837 = vsel %vm24, %v835, 0
  %v840 = vsel %vm31, %v834, 0
  %842 = vmatprep.subr.mxu0 0.0
  %843 = vmatpush1.msra.mxu0 %v833
  %844 = vmatprep.subr.mxu0 0.0
  %845 = vmatpush1.msra.mxu0 %v840
  %846 = vmatprep.subr.mxu0 0.0
  %847 = vmatpush1.msra.mxu0 0.0
  %848 = vmatprep.subr.mxu0 0.0
  %849 = vmatpush1.msra.mxu0 0.0
  %850 = vmatprep.subr.mxu0 0.0
  %851 = vmatpush1.msra.mxu0 0.0
  %852 = vmatprep.subr.mxu0 0.0
  %853 = vmatpush1.msra.mxu0 0.0
  %854 = vmatprep.subr.mxu0 0.0
  %855 = vmatpush1.msra.mxu0 0.0
  %856 = vmatprep.subr.mxu0 0.0
  %857 = vmatpush1.msra.mxu0 0.0
  %858 = vmatprep.subr.mxu0 0.0
  %859 = vmatpush1.msra.mxu0 0.0
  %860 = vmatprep.subr.mxu0 0.0
  %861 = vmatpush1.msra.mxu0 0.0
  %862 = vmatprep.subr.mxu0 0.0
  %863 = vmatpush1.msra.mxu0 0.0
  %864 = vmatprep.subr.mxu0 0.0
  %865 = vmatpush1.msra.mxu0 0.0
  %866 = vmatprep.subr.mxu0 0.0
  %867 = vmatpush1.msra.mxu0 0.0
  %868 = vmatprep.subr.mxu0 0.0
  %869 = vmatpush1.msra.mxu0 0.0
  %870 = vmatprep.subr.mxu0 0.0
  %871 = vmatpush1.msra.mxu0 0.0
  %872 = vmatprep.subr.mxu0 0.0
  %873 = vmatpush1.msra.mxu0 0.0
  %874 = vmatprep.subr.mxu0 0.0
  %875 = vmatpush1.msra.mxu0 0.0
  %876 = vmatprep.subr.mxu0 0.0
  %877 = vmatpush1.msra.mxu0 0.0
  %878 = vmatprep.subr.mxu0 0.0
  %879 = vmatpush1.msra.mxu0 0.0
  %880 = vmatprep.subr.mxu0 0.0
  %881 = vmatpush1.msra.mxu0 0.0
  %882 = vmatprep.subr.mxu0 0.0
  %883 = vmatpush1.msra.mxu0 0.0
  %884 = vmatprep.subr.mxu0 0.0
  %885 = vmatpush1.msra.mxu0 0.0
  %886 = vmatprep.subr.mxu0 0.0
  %887 = vmatpush1.msra.mxu0 0.0
  %888 = vmatprep.subr.mxu0 0.0
  %889 = vmatpush1.msra.mxu0 0.0
  %890 = vmatprep.subr.mxu0 0.0
  %891 = vmatpush1.msra.mxu0 0.0
  %892 = vmatprep.subr.mxu0 0.0
  %893 = vmatpush1.msra.mxu0 0.0
  %894 = vmatprep.subr.mxu0 0.0
  %895 = vmatpush1.msra.mxu0 0.0
  %896 = vmatprep.subr.mxu0 0.0
  %897 = vmatpush1.msra.mxu0 0.0
  %898 = vmatprep.subr.mxu0 0.0
  %899 = vmatpush1.msra.mxu0 0.0
  %900 = vmatprep.subr.mxu0 0.0
  %901 = vmatpush1.msra.mxu0 0.0
  %902 = vmatprep.subr.mxu0 0.0
  %903 = vmatpush1.msra.mxu0 0.0
  %904 = vmatprep.subr.mxu0 0.0
  %905 = vmatpush1.msra.mxu0 0.0
  %906 = vmatprep.mubr.f32.mxu0 0.0
  %907 = vmatmul.mubr.f32.gmra.mrb[0].mxu0 %v837
  %v908 = vpop.f32.mrb[0].mxu0
  %v909 = vadd.f32 0.0, %v908
  %v910 = vpop.f32.mrb[0].mxu0
  %911 = vdwg.mxu0
  %v912 = vld [vmem:[%s3] sm:$0x3]
  %v913 = vld [vmem:[%s4 + $0x80] sm:$0xff]
  %v914 = vld [vmem:[%s4 + $0x88] sm:$0x1]
  %v915 = vlaneseq
  %v916 = vshrl.u32 %v915, 7
  %v917 = vsub.s32 0, %v916
  %v918 = vrot.slane %v914, %v917
  %v920 = vsel %vm648, %v912, 0
  %922 = vmatprep.subr.mxu0 0.0
  %923 = vmatpush1.msra.mxu0 %v913
  %924 = vmatprep.subr.mxu0 0.0
  %925 = vmatpush1.msra.mxu0 0.0
  %926 = vmatprep.subr.mxu0 0.0
  %927 = vmatpush1.msra.mxu0 0.0
  %928 = vmatprep.subr.mxu0 0.0
  %929 = vmatpush1.msra.mxu0 0.0
  %930 = vmatprep.subr.mxu0 0.0
  %931 = vmatpush1.msra.mxu0 0.0
  %932 = vmatprep.subr.mxu0 0.0
  %933 = vmatpush1.msra.mxu0 0.0
  %934 = vmatprep.subr.mxu0 0.0
  %935 = vmatpush1.msra.mxu0 0.0
  %936 = vmatprep.subr.mxu0 0.0
  %937 = vmatpush1.msra.mxu0 0.0
  %938 = vmatprep.subr.mxu0 0.0
  %939 = vmatpush1.msra.mxu0 0.0
  %940 = vmatprep.subr.mxu0 0.0
  %941 = vmatpush1.msra.mxu0 0.0
  %942 = vmatprep.subr.mxu0 0.0
  %943 = vmatpush1.msra.mxu0 0.0
  %944 = vmatprep.subr.mxu0 0.0
  %945 = vmatpush1.msra.mxu0 0.0
  %946 = vmatprep.subr.mxu0 0.0
  %947 = vmatpush1.msra.mxu0 0.0
  %948 = vmatprep.subr.mxu0 0.0
  %949 = vmatpush1.msra.mxu0 0.0
  %950 = vmatprep.subr.mxu0 0.0
  %951 = vmatpush1.msra.mxu0 0.0
  %952 = vmatprep.subr.mxu0 0.0
  %953 = vmatpush1.msra.mxu0 0.0
  %954 = vmatprep.subr.mxu0 0.0
  %955 = vmatpush1.msra.mxu0 0.0
  %956 = vmatprep.subr.mxu0 0.0
  %957 = vmatpush1.msra.mxu0 0.0
  %958 = vmatprep.subr.mxu0 0.0
  %959 = vmatpush1.msra.mxu0 0.0
  %960 = vmatprep.subr.mxu0 0.0
  %961 = vmatpush1.msra.mxu0 0.0
  %962 = vmatprep.subr.mxu0 0.0
  %963 = vmatpush1.msra.mxu0 0.0
  %964 = vmatprep.subr.mxu0 0.0
  %965 = vmatpush1.msra.mxu0 0.0
  %966 = vmatprep.subr.mxu0 0.0
  %967 = vmatpush1.msra.mxu0 0.0
  %968 = vmatprep.subr.mxu0 0.0
  %969 = vmatpush1.msra.mxu0 0.0
  %970 = vmatprep.subr.mxu0 0.0
  %971 = vmatpush1.msra.mxu0 0.0
  %972 = vmatprep.subr.mxu0 0.0
  %973 = vmatpush1.msra.mxu0 0.0
  %974 = vmatprep.subr.mxu0 0.0
  %975 = vmatpush1.msra.mxu0 0.0
  %976 = vmatprep.subr.mxu0 0.0
  %977 = vmatpush1.msra.mxu0 0.0
  %978 = vmatprep.subr.mxu0 0.0
  %979 = vmatpush1.msra.mxu0 0.0
  %980 = vmatprep.subr.mxu0 0.0
  %981 = vmatpush1.msra.mxu0 0.0
  %982 = vmatprep.subr.mxu0 0.0
  %983 = vmatpush1.msra.mxu0 0.0
  %984 = vmatprep.subr.mxu0 0.0
  %985 = vmatpush1.msra.mxu0 0.0
  %986 = vmatprep.mubr.f32.mxu0 0.0
  %987 = vmatmul.mubr.f32.gmra.mrb[0].mxu0 %v920
  %v988 = vpop.f32.mrb[0].mxu0
  %v989 = vadd.f32 %v918, %v988
  %v990 = vpop.f32.mrb[0].mxu0
  %991 = vdwg.mxu0
  %v992 = vmax.f32 %v989, 0.0
  %v993 = vld [vmem:[%s4 + $0x90] sm:$0xff]
  %v994 = vld [vmem:[%s4 + $0x98] sm:$0xff]
  %v995 = vld [vmem:[%s4 + $0xa0] sm:$0x1]
  %v996 = vlaneseq
  %v997 = vshrl.u32 %v996, 7
  %v998 = vsub.s32 0, %v997
  %v999 = vrot.slane %v995, %v998
  %v1001 = vsel %vm288, %v992, 0
  %1003 = vmatprep.subr.mxu0 0.0
  %1004 = vmatpush1.msra.mxu0 %v993
  %1005 = vmatprep.subr.mxu0 0.0
  %1006 = vmatpush1.msra.mxu0 %v994
  %1007 = vmatprep.subr.mxu0 0.0
  %1008 = vmatpush1.msra.mxu0 0.0
  %1009 = vmatprep.subr.mxu0 0.0
  %1010 = vmatpush1.msra.mxu0 0.0
  %1011 = vmatprep.subr.mxu0 0.0
  %1012 = vmatpush1.msra.mxu0 0.0
  %1013 = vmatprep.subr.mxu0 0.0
  %1014 = vmatpush1.msra.mxu0 0.0
  %1015 = vmatprep.subr.mxu0 0.0
  %1016 = vmatpush1.msra.mxu0 0.0
  %1017 = vmatprep.subr.mxu0 0.0
  %1018 = vmatpush1.msra.mxu0 0.0
  %1019 = vmatprep.subr.mxu0 0.0
  %1020 = vmatpush1.msra.mxu0 0.0
  %1021 = vmatprep.subr.mxu0 0.0
  %1022 = vmatpush1.msra.mxu0 0.0
  %1023 = vmatprep.subr.mxu0 0.0
  %1024 = vmatpush1.msra.mxu0 0.0
  %1025 = vmatprep.subr.mxu0 0.0
  %1026 = vmatpush1.msra.mxu0 0.0
  %1027 = vmatprep.subr.mxu0 0.0
  %1028 = vmatpush1.msra.mxu0 0.0
  %1029 = vmatprep.subr.mxu0 0.0
  %1030 = vmatpush1.msra.mxu0 0.0
  %1031 = vmatprep.subr.mxu0 0.0
  %1032 = vmatpush1.msra.mxu0 0.0
  %1033 = vmatprep.subr.mxu0 0.0
  %1034 = vmatpush1.msra.mxu0 0.0
  %1035 = vmatprep.subr.mxu0 0.0
  %1036 = vmatpush1.msra.mxu0 0.0
  %1037 = vmatprep.subr.mxu0 0.0
  %1038 = vmatpush1.msra.mxu0 0.0
  %1039 = vmatprep.subr.mxu0 0.0
  %1040 = vmatpush1.msra.mxu0 0.0
  %1041 = vmatprep.subr.mxu0 0.0
  %1042 = vmatpush1.msra.mxu0 0.0
  %1043 = vmatprep.subr.mxu0 0.0
  %1044 = vmatpush1.msra.mxu0 0.0
  %1045 = vmatprep.subr.mxu0 0.0
  %1046 = vmatpush1.msra.mxu0 0.0
  %1047 = vmatprep.subr.mxu0 0.0
  %1048 = vmatpush1.msra.mxu0 0.0
  %1049 = vmatprep.subr.mxu0 0.0
  %1050 = vmatpush1.msra.mxu0 0.0
  %1051 = vmatprep.subr.mxu0 0.0
  %1052 = vmatpush1.msra.mxu0 0.0
  %1053 = vmatprep.subr.mxu0 0.0
  %1054 = vmatpush1.msra.mxu0 0.0
  %1055 = vmatprep.subr.mxu0 0.0
  %1056 = vmatpush1.msra.mxu0 0.0
  %1057 = vmatprep.subr.mxu0 0.0
  %1058 = vmatpush1.msra.mxu0 0.0
  %1059 = vmatprep.subr.mxu0 0.0
  %1060 = vmatpush1.msra.mxu0 0.0
  %1061 = vmatprep.subr.mxu0 0.0
  %1062 = vmatpush1.msra.mxu0 0.0
  %1063 = vmatprep.subr.mxu0 0.0
  %1064 = vmatpush1.msra.mxu0 0.0
  %1065 = vmatprep.subr.mxu0 0.0
  %1066 = vmatpush1.msra.mxu0 0.0
  %1067 = vmatprep.mubr.f32.mxu0 0.0
  %1068 = vmatmul.mubr.f32.gmra.mrb[0].mxu0 %v1001
  %v1069 = vpop.f32.mrb[0].mxu0
  %v1070 = vadd.f32 %v999, %v1069
  %v1071 = vpop.f32.mrb[0].mxu0
  %1072 = vdwg.mxu0
  %v1073 = vmax.f32 %v1070, 0.0
  %v1074 = vld [vmem:[%s4 + $0xa8] sm:$0xff]
  %v1075 = vld [vmem:[%s4 + $0xb0] sm:$0xff]
  %v1076 = vld [vmem:[%s4 + $0xb8] sm:$0x1]
  %v1077 = vlaneseq
  %v1078 = vshrl.u32 %v1077, 7
  %v1079 = vsub.s32 0, %v1078
  %v1080 = vrot.slane %v1076, %v1079
  %v1082 = vsel %vm288, %v1073, 0
  %1084 = vmatprep.subr.mxu0 0.0
  %1085 = vmatpush1.msra.mxu0 %v1074
  %1086 = vmatprep.subr.mxu0 0.0
  %1087 = vmatpush1.msra.mxu0 %v1075
  %1088 = vmatprep.subr.mxu0 0.0
  %1089 = vmatpush1.msra.mxu0 0.0
  %1090 = vmatprep.subr.mxu0 0.0
  %1091 = vmatpush1.msra.mxu0 0.0
  %1092 = vmatprep.subr.mxu0 0.0
  %1093 = vmatpush1.msra.mxu0 0.0
  %1094 = vmatprep.subr.mxu0 0.0
  %1095 = vmatpush1.msra.mxu0 0.0
  %1096 = vmatprep.subr.mxu0 0.0
  %1097 = vmatpush1.msra.mxu0 0.0
  %1098 = vmatprep.subr.mxu0 0.0
  %1099 = vmatpush1.msra.mxu0 0.0
  %1100 = vmatprep.subr.mxu0 0.0
  %1101 = vmatpush1.msra.mxu0 0.0
  %1102 = vmatprep.subr.mxu0 0.0
  %1103 = vmatpush1.msra.mxu0 0.0
  %1104 = vmatprep.subr.mxu0 0.0
  %1105 = vmatpush1.msra.mxu0 0.0
  %1106 = vmatprep.subr.mxu0 0.0
  %1107 = vmatpush1.msra.mxu0 0.0
  %1108 = vmatprep.subr.mxu0 0.0
  %1109 = vmatpush1.msra.mxu0 0.0
  %1110 = vmatprep.subr.mxu0 0.0
  %1111 = vmatpush1.msra.mxu0 0.0
  %1112 = vmatprep.subr.mxu0 0.0
  %1113 = vmatpush1.msra.mxu0 0.0
  %1114 = vmatprep.subr.mxu0 0.0
  %1115 = vmatpush1.msra.mxu0 0.0
  %1116 = vmatprep.subr.mxu0 0.0
  %1117 = vmatpush1.msra.mxu0 0.0
  %1118 = vmatprep.subr.mxu0 0.0
  %1119 = vmatpush1.msra.mxu0 0.0
  %1120 = vmatprep.subr.mxu0 0.0
  %1121 = vmatpush1.msra.mxu0 0.0
  %1122 = vmatprep.subr.mxu0 0.0
  %1123 = vmatpush1.msra.mxu0 0.0
  %1124 = vmatprep.subr.mxu0 0.0
  %1125 = vmatpush1.msra.mxu0 0.0
  %1126 = vmatprep.subr.mxu0 0.0
  %1127 = vmatpush1.msra.mxu0 0.0
  %1128 = vmatprep.subr.mxu0 0.0
  %1129 = vmatpush1.msra.mxu0 0.0
  %1130 = vmatprep.subr.mxu0 0.0
  %1131 = vmatpush1.msra.mxu0 0.0
  %1132 = vmatprep.subr.mxu0 0.0
  %1133 = vmatpush1.msra.mxu0 0.0
  %1134 = vmatprep.subr.mxu0 0.0
  %1135 = vmatpush1.msra.mxu0 0.0
  %1136 = vmatprep.subr.mxu0 0.0
  %1137 = vmatpush1.msra.mxu0 0.0
  %1138 = vmatprep.subr.mxu0 0.0
  %1139 = vmatpush1.msra.mxu0 0.0
  %1140 = vmatprep.subr.mxu0 0.0
  %1141 = vmatpush1.msra.mxu0 0.0
  %1142 = vmatprep.subr.mxu0 0.0
  %1143 = vmatpush1.msra.mxu0 0.0
  %1144 = vmatprep.subr.mxu0 0.0
  %1145 = vmatpush1.msra.mxu0 0.0
  %1146 = vmatprep.subr.mxu0 0.0
  %1147 = vmatpush1.msra.mxu0 0.0
  %1148 = vmatprep.mubr.f32.mxu0 0.0
  %1149 = vmatmul.mubr.f32.gmra.mrb[0].mxu0 %v1082
  %v1150 = vpop.f32.mrb[0].mxu0
  %v1151 = vadd.f32 %v1080, %v1150
  %v1152 = vpop.f32.mrb[0].mxu0
  %1153 = vdwg.mxu0
  %v1154 = vmax.f32 %v1151, 0.0
  %1156 = vrot.lane.b32.xlu0 %v1154, 8
  %v1157 = vpop.permute.xlu0 %1156
  %v1159 = vsel %vm648, %v909, %v1157
  %v1160 = vld [vmem:[%s4 + $0xc0] sm:$0xff]
  %v1161 = vld [vmem:[%s4 + $0xc8] sm:$0xff]
  %v1162 = vld [vmem:[%s4 + $0xd0] sm:$0x1]
  %v1163 = vlaneseq
  %v1164 = vshrl.u32 %v1163, 7
  %v1165 = vsub.s32 0, %v1164
  %v1166 = vrot.slane %v1162, %v1165
  %v1168 = vsel %vm288, %v1159, 0
  %1170 = vmatprep.subr.mxu0 0.0
  %1171 = vmatpush1.msra.mxu0 %v1160
  %1172 = vmatprep.subr.mxu0 0.0
  %1173 = vmatpush1.msra.mxu0 %v1161
  %1174 = vmatprep.subr.mxu0 0.0
  %1175 = vmatpush1.msra.mxu0 0.0
  %1176 = vmatprep.subr.mxu0 0.0
  %1177 = vmatpush1.msra.mxu0 0.0
  %1178 = vmatprep.subr.mxu0 0.0
  %1179 = vmatpush1.msra.mxu0 0.0
  %1180 = vmatprep.subr.mxu0 0.0
  %1181 = vmatpush1.msra.mxu0 0.0
  %1182 = vmatprep.subr.mxu0 0.0
  %1183 = vmatpush1.msra.mxu0 0.0
  %1184 = vmatprep.subr.mxu0 0.0
  %1185 = vmatpush1.msra.mxu0 0.0
  %1186 = vmatprep.subr.mxu0 0.0
  %1187 = vmatpush1.msra.mxu0 0.0
  %1188 = vmatprep.subr.mxu0 0.0
  %1189 = vmatpush1.msra.mxu0 0.0
  %1190 = vmatprep.subr.mxu0 0.0
  %1191 = vmatpush1.msra.mxu0 0.0
  %1192 = vmatprep.subr.mxu0 0.0
  %1193 = vmatpush1.msra.mxu0 0.0
  %1194 = vmatprep.subr.mxu0 0.0
  %1195 = vmatpush1.msra.mxu0 0.0
  %1196 = vmatprep.subr.mxu0 0.0
  %1197 = vmatpush1.msra.mxu0 0.0
  %1198 = vmatprep.subr.mxu0 0.0
  %1199 = vmatpush1.msra.mxu0 0.0
  %1200 = vmatprep.subr.mxu0 0.0
  %1201 = vmatpush1.msra.mxu0 0.0
  %1202 = vmatprep.subr.mxu0 0.0
  %1203 = vmatpush1.msra.mxu0 0.0
  %1204 = vmatprep.subr.mxu0 0.0
  %1205 = vmatpush1.msra.mxu0 0.0
  %1206 = vmatprep.subr.mxu0 0.0
  %1207 = vmatpush1.msra.mxu0 0.0
  %1208 = vmatprep.subr.mxu0 0.0
  %1209 = vmatpush1.msra.mxu0 0.0
  %1210 = vmatprep.subr.mxu0 0.0
  %1211 = vmatpush1.msra.mxu0 0.0
  %1212 = vmatprep.subr.mxu0 0.0
  %1213 = vmatpush1.msra.mxu0 0.0
  %1214 = vmatprep.subr.mxu0 0.0
  %1215 = vmatpush1.msra.mxu0 0.0
  %1216 = vmatprep.subr.mxu0 0.0
  %1217 = vmatpush1.msra.mxu0 0.0
  %1218 = vmatprep.subr.mxu0 0.0
  %1219 = vmatpush1.msra.mxu0 0.0
  %1220 = vmatprep.subr.mxu0 0.0
  %1221 = vmatpush1.msra.mxu0 0.0
  %1222 = vmatprep.subr.mxu0 0.0
  %1223 = vmatpush1.msra.mxu0 0.0
  %1224 = vmatprep.subr.mxu0 0.0
  %1225 = vmatpush1.msra.mxu0 0.0
  %1226 = vmatprep.subr.mxu0 0.0
  %1227 = vmatpush1.msra.mxu0 0.0
  %1228 = vmatprep.subr.mxu0 0.0
  %1229 = vmatpush1.msra.mxu0 0.0
  %1230 = vmatprep.subr.mxu0 0.0
  %1231 = vmatpush1.msra.mxu0 0.0
  %1232 = vmatprep.subr.mxu0 0.0
  %1233 = vmatpush1.msra.mxu0 0.0
  %1234 = vmatprep.mubr.f32.mxu0 0.0
  %1235 = vmatmul.mubr.f32.gmra.mrb[0].mxu0 %v1168
  %v1236 = vpop.f32.mrb[0].mxu0
  %v1237 = vadd.f32 %v1166, %v1236
  %v1238 = vpop.f32.mrb[0].mxu0
  %1239 = vdwg.mxu0
  %v1240 = vmax.f32 %v1237, 0.0
  %v1241 = vld [vmem:[%s4 + $0xd8] sm:$0xff]
  %v1242 = vld [vmem:[%s4 + $0xe0] sm:$0xff]
  %v1243 = vld [vmem:[%s4 + $0xe8] sm:$0x1]
  %v1244 = vlaneseq
  %v1245 = vshrl.u32 %v1244, 7
  %v1246 = vsub.s32 0, %v1245
  %v1247 = vrot.slane %v1243, %v1246
  %v1249 = vsel %vm288, %v1240, 0
  %1251 = vmatprep.subr.mxu0 0.0
  %1252 = vmatpush1.msra.mxu0 %v1241
  %1253 = vmatprep.subr.mxu0 0.0
  %1254 = vmatpush1.msra.mxu0 %v1242
  %1255 = vmatprep.subr.mxu0 0.0
  %1256 = vmatpush1.msra.mxu0 0.0
  %1257 = vmatprep.subr.mxu0 0.0
  %1258 = vmatpush1.msra.mxu0 0.0
  %1259 = vmatprep.subr.mxu0 0.0
  %1260 = vmatpush1.msra.mxu0 0.0
  %1261 = vmatprep.subr.mxu0 0.0
  %1262 = vmatpush1.msra.mxu0 0.0
  %1263 = vmatprep.subr.mxu0 0.0
  %1264 = vmatpush1.msra.mxu0 0.0
  %1265 = vmatprep.subr.mxu0 0.0
  %1266 = vmatpush1.msra.mxu0 0.0
  %1267 = vmatprep.subr.mxu0 0.0
  %1268 = vmatpush1.msra.mxu0 0.0
  %1269 = vmatprep.subr.mxu0 0.0
  %1270 = vmatpush1.msra.mxu0 0.0
  %1271 = vmatprep.subr.mxu0 0.0
  %1272 = vmatpush1.msra.mxu0 0.0
  %1273 = vmatprep.subr.mxu0 0.0
  %1274 = vmatpush1.msra.mxu0 0.0
  %1275 = vmatprep.subr.mxu0 0.0
  %1276 = vmatpush1.msra.mxu0 0.0
  %1277 = vmatprep.subr.mxu0 0.0
  %1278 = vmatpush1.msra.mxu0 0.0
  %1279 = vmatprep.subr.mxu0 0.0
  %1280 = vmatpush1.msra.mxu0 0.0
  %1281 = vmatprep.subr.mxu0 0.0
  %1282 = vmatpush1.msra.mxu0 0.0
  %1283 = vmatprep.subr.mxu0 0.0
  %1284 = vmatpush1.msra.mxu0 0.0
  %1285 = vmatprep.subr.mxu0 0.0
  %1286 = vmatpush1.msra.mxu0 0.0
  %1287 = vmatprep.subr.mxu0 0.0
  %1288 = vmatpush1.msra.mxu0 0.0
  %1289 = vmatprep.subr.mxu0 0.0
  %1290 = vmatpush1.msra.mxu0 0.0
  %1291 = vmatprep.subr.mxu0 0.0
  %1292 = vmatpush1.msra.mxu0 0.0
  %1293 = vmatprep.subr.mxu0 0.0
  %1294 = vmatpush1.msra.mxu0 0.0
  %1295 = vmatprep.subr.mxu0 0.0
  %1296 = vmatpush1.msra.mxu0 0.0
  %1297 = vmatprep.subr.mxu0 0.0
  %1298 = vmatpush1.msra.mxu0 0.0
  %1299 = vmatprep.subr.mxu0 0.0
  %1300 = vmatpush1.msra.mxu0 0.0
  %1301 = vmatprep.subr.mxu0 0.0
  %1302 = vmatpush1.msra.mxu0 0.0
  %1303 = vmatprep.subr.mxu0 0.0
  %1304 = vmatpush1.msra.mxu0 0.0
  %1305 = vmatprep.subr.mxu0 0.0
  %1306 = vmatpush1.msra.mxu0 0.0
  %1307 = vmatprep.subr.mxu0 0.0
  %1308 = vmatpush1.msra.mxu0 0.0
  %1309 = vmatprep.subr.mxu0 0.0
  %1310 = vmatpush1.msra.mxu0 0.0
  %1311 = vmatprep.subr.mxu0 0.0
  %1312 = vmatpush1.msra.mxu0 0.0
  %1313 = vmatprep.subr.mxu0 0.0
  %1314 = vmatpush1.msra.mxu0 0.0
  %1315 = vmatprep.mubr.f32.mxu0 0.0
  %1316 = vmatmul.mubr.f32.gmra.mrb[0].mxu0 %v1249
  %v1317 = vpop.f32.mrb[0].mxu0
  %v1318 = vadd.f32 %v1247, %v1317
  %v1319 = vpop.f32.mrb[0].mxu0
  %1320 = vdwg.mxu0
  %v1321 = vmax.f32 %v1318, 0.0
  %v1322 = vld [vmem:[%s4 + $0xf0] sm:$0xff]
  %v1323 = vld [vmem:[%s4 + $0xf8] sm:$0xff]
  %v1324 = vld [vmem:[%s4 + $0x100] sm:$0x1]
  %v1325 = vlaneseq
  %v1326 = vshrl.u32 %v1325, 7
  %v1327 = vsub.s32 0, %v1326
  %v1328 = vrot.slane %v1324, %v1327
  %v1330 = vsel %vm288, %v1321, 0
  %1332 = vmatprep.subr.mxu0 0.0
  %1333 = vmatpush1.msra.mxu0 %v1322
  %1334 = vmatprep.subr.mxu0 0.0
  %1335 = vmatpush1.msra.mxu0 %v1323
  %1336 = vmatprep.subr.mxu0 0.0
  %1337 = vmatpush1.msra.mxu0 0.0
  %1338 = vmatprep.subr.mxu0 0.0
  %1339 = vmatpush1.msra.mxu0 0.0
  %1340 = vmatprep.subr.mxu0 0.0
  %1341 = vmatpush1.msra.mxu0 0.0
  %1342 = vmatprep.subr.mxu0 0.0
  %1343 = vmatpush1.msra.mxu0 0.0
  %1344 = vmatprep.subr.mxu0 0.0
  %1345 = vmatpush1.msra.mxu0 0.0
  %1346 = vmatprep.subr.mxu0 0.0
  %1347 = vmatpush1.msra.mxu0 0.0
  %1348 = vmatprep.subr.mxu0 0.0
  %1349 = vmatpush1.msra.mxu0 0.0
  %1350 = vmatprep.subr.mxu0 0.0
  %1351 = vmatpush1.msra.mxu0 0.0
  %1352 = vmatprep.subr.mxu0 0.0
  %1353 = vmatpush1.msra.mxu0 0.0
  %1354 = vmatprep.subr.mxu0 0.0
  %1355 = vmatpush1.msra.mxu0 0.0
  %1356 = vmatprep.subr.mxu0 0.0
  %1357 = vmatpush1.msra.mxu0 0.0
  %1358 = vmatprep.subr.mxu0 0.0
  %1359 = vmatpush1.msra.mxu0 0.0
  %1360 = vmatprep.subr.mxu0 0.0
  %1361 = vmatpush1.msra.mxu0 0.0
  %1362 = vmatprep.subr.mxu0 0.0
  %1363 = vmatpush1.msra.mxu0 0.0
  %1364 = vmatprep.subr.mxu0 0.0
  %1365 = vmatpush1.msra.mxu0 0.0
  %1366 = vmatprep.subr.mxu0 0.0
  %1367 = vmatpush1.msra.mxu0 0.0
  %1368 = vmatprep.subr.mxu0 0.0
  %1369 = vmatpush1.msra.mxu0 0.0
  %1370 = vmatprep.subr.mxu0 0.0
  %1371 = vmatpush1.msra.mxu0 0.0
  %1372 = vmatprep.subr.mxu0 0.0
  %1373 = vmatpush1.msra.mxu0 0.0
  %1374 = vmatprep.subr.mxu0 0.0
  %1375 = vmatpush1.msra.mxu0 0.0
  %1376 = vmatprep.subr.mxu0 0.0
  %1377 = vmatpush1.msra.mxu0 0.0
  %1378 = vmatprep.subr.mxu0 0.0
  %1379 = vmatpush1.msra.mxu0 0.0
  %1380 = vmatprep.subr.mxu0 0.0
  %1381 = vmatpush1.msra.mxu0 0.0
  %1382 = vmatprep.subr.mxu0 0.0
  %1383 = vmatpush1.msra.mxu0 0.0
  %1384 = vmatprep.subr.mxu0 0.0
  %1385 = vmatpush1.msra.mxu0 0.0
  %1386 = vmatprep.subr.mxu0 0.0
  %1387 = vmatpush1.msra.mxu0 0.0
  %1388 = vmatprep.subr.mxu0 0.0
  %1389 = vmatpush1.msra.mxu0 0.0
  %1390 = vmatprep.subr.mxu0 0.0
  %1391 = vmatpush1.msra.mxu0 0.0
  %1392 = vmatprep.subr.mxu0 0.0
  %1393 = vmatpush1.msra.mxu0 0.0
  %1394 = vmatprep.subr.mxu0 0.0
  %1395 = vmatpush1.msra.mxu0 0.0
  %1396 = vmatprep.mubr.f32.mxu0 0.0
  %1397 = vmatmul.mubr.f32.gmra.mrb[0].mxu0 %v1330
  %v1398 = vpop.f32.mrb[0].mxu0
  %v1399 = vadd.f32 %v1328, %v1398
  %v1400 = vpop.f32.mrb[0].mxu0
  %1401 = vdwg.mxu0
  %vm1402 = vcmask 1024
  %1403 = vst.msk [vmem:[%s5] sm:$0x3] %vm1402, %v1399
  // Predicated region
  $region22: #{tagconv_model_forward.1} parent=0 // pred_check
    _
  $region23: #{tagconv_model_forward.1} parent=0 // pred_check_branch
    %1405 = sbr.rel (0) target = $region25
  $region24: #{tagconv_model_forward.1} parent=0 // pred_region
    _
  $region25: #{tagconv_model_forward.1} parent=0 // pred_fallthru
    _
  // Predicated region
  $region26: #{tagconv_model_forward.1} parent=0 // pred_check
    _
  $region27: #{tagconv_model_forward.1} parent=0 // pred_check_branch
    %1407 = sbr.rel (0) target = $region29
  $region28: #{tagconv_model_forward.1} parent=0 // pred_region
    _
  $region29: #{tagconv_model_forward.1} parent=0 // pred_fallthru
    _

</llo_original>
